<compile_context>
chip_gen: v6e
topology: v6e:2x2x1
jax: 0.10.0
libtpu: 0.0.40
codegen_flags: <defaults>
</compile_context>

<pallas_src>
import jax
import jax.numpy as jnp
from jax.experimental import pallas as pl
from jax.experimental.pallas import tpu as pltpu


def _round_up(x, m):
    return (x + m - 1) // m * m


def _encoder_kernel(x_ref, w1_ref, b1_ref, w2_ref, b2_ref, o_ref):
    # Layer 1: Linear + ReLU. MXU matmul with f32 accumulation; bias add / ReLU in f32.
    x = x_ref[...]                                              # (tm, dim_in)
    h = jnp.dot(x, w1_ref[...], preferred_element_type=jnp.float32)
    h = jnp.maximum(h + b1_ref[...].astype(jnp.float32), 0.0)   # (tm, dim_in) f32
    # Layer 2: Linear. h is cast to the (explicitly chosen) weight compute dtype for the
    # second MXU pass; accumulation stays f32.
    f = jnp.dot(h.astype(w2_ref.dtype), w2_ref[...],
                preferred_element_type=jnp.float32)
    f = f + b2_ref[...].astype(jnp.float32)                     # (tm, dft) f32
    # L2 normalize along the feature dim. Padded feature columns (if any) are exactly
    # zero (zero-padded W2/b2), so they do not perturb the squared norm. rsqrt of the
    # clamped squared norm == 1/max(||f||, 1e-12) as in F.normalize, modulo rsqrt
    # rounding (single EUP op + VPU multiply instead of sqrt + divide).
    sq = jnp.sum(f * f, axis=1, keepdims=True)                  # (tm, 1)
    inv = jax.lax.rsqrt(jnp.maximum(sq, 1e-24))
    o_ref[...] = (f * inv).astype(o_ref.dtype)


def _vmem_ceiling_bytes():
    cap = 64 << 20  # conservative default if the query is unavailable
    try:
        info = pltpu.get_tpu_info()
        cap = int(getattr(info, "vmem_capacity_bytes", cap))
    except Exception:
        pass
    # Leave headroom for Mosaic internal scratch / pipeline buffers:
    #   v7x (64 MiB)  -> ~52 MiB ceiling;  v5e/v6e (128 MiB) -> ~104 MiB ceiling.
    return max(32 << 20, min(cap - (12 << 20), 104 << 20))


def contrastive_encoder(x, w1, b1, w2, b2, *, tm=512, compute_dtype=None):
    """x: (N, dim_in); w1: (dim_in, dim_in); b1: (dim_in,); w2: (dim_in, feat_dim);
    b2: (feat_dim,). Weights are pre-transposed vs. torch nn.Linear (y = x @ W + b).
    compute_dtype (optional, e.g. jnp.bfloat16) is the explicit matmul input dtype;
    accumulation and the normalize epilogue are always f32. Returns (N, feat_dim)."""
    N, dim_in = x.shape
    feat_dim = w2.shape[1]
    out_dtype = x.dtype

    if compute_dtype is not None:
        x = x.astype(compute_dtype)
        w1 = w1.astype(compute_dtype)
        w2 = w2.astype(compute_dtype)

    b1 = jnp.reshape(b1, (1, dim_in))
    b2 = jnp.reshape(b2, (1, feat_dim))

    # Lane-dense output padding only where it pays; small feat_dim keeps native width.
    pad_feat = (feat_dim % 128 != 0) and (feat_dim >= 64)
    dft = _round_up(feat_dim, 128) if pad_feat else feat_dim
    if pad_feat:
        w2 = jnp.zeros((dim_in, dft), w2.dtype).at[:, :feat_dim].set(w2)
        b2 = jnp.zeros((1, dft), b2.dtype).at[:, :feat_dim].set(b2)

    # dtype-aware sublane rounding for the row tile.
    sub = {2: 16, 1: 32}.get(jnp.dtype(x.dtype).itemsize, 8)

    # Cap tm so the grid has ~8 steps (pipelining + megacore sharding engage).
    tm = _round_up(max(int(tm), sub), sub)
    tm_cap = _round_up(max(pl.cdiv(N, 8), sub), sub)
    tm = max(sub, min(tm, tm_cap))

    # VMEM footprint: double-buffered x/out tiles, (worst case double-buffered) resident
    # weights/biases, plus the f32 intermediates h and f — per-operand itemsizes.
    x_b = jnp.dtype(x.dtype).itemsize
    o_b = jnp.dtype(out_dtype).itemsize
    w_b = jnp.dtype(w1.dtype).itemsize
    bias_b = jnp.dtype(b1.dtype).itemsize

    def _footprint(tm_):
        return (2 * tm_ * dim_in * x_b
                + 2 * tm_ * dft * o_b
                + 2 * ((dim_in * dim_in + dim_in * dft) * w_b + (dim_in + dft) * bias_b)
                + tm_ * (dim_in + dft) * 4)

    ceiling = _vmem_ceiling_bytes()
    while _footprint(tm) + (8 << 20) > ceiling and tm > sub:
        new_tm = max(sub, _round_up(tm // 2, sub))
        if new_tm == tm:
            break
        tm = new_tm

    grid = (pl.cdiv(N, tm),)
    vmem_limit = int(min(max(_footprint(tm) + (8 << 20), 32 << 20), ceiling))

    def _specs(weight_pipeline_mode):
        kw = {} if weight_pipeline_mode is None else {"pipeline_mode": weight_pipeline_mode}
        in_specs = [
            pl.BlockSpec((tm, dim_in), lambda i: (i, 0)),            # x row tile (ragged tail OK)
            pl.BlockSpec((dim_in, dim_in), lambda i: (0, 0), **kw),  # W1 resident
            pl.BlockSpec((1, dim_in), lambda i: (0, 0), **kw),       # b1 resident
            pl.BlockSpec((dim_in, dft), lambda i: (0, 0), **kw),     # W2 resident
            pl.BlockSpec((1, dft), lambda i: (0, 0), **kw),          # b2 resident
        ]
        out_specs = pl.BlockSpec((tm, dft), lambda i: (i, 0))
        return in_specs, out_specs

    def _run(weight_pipeline_mode):
        in_specs, out_specs = _specs(weight_pipeline_mode)
        return pl.pallas_call(
            _encoder_kernel,
            out_shape=jax.ShapeDtypeStruct((N, dft), out_dtype),
            grid_spec=pltpu.PrefetchScalarGridSpec(
                num_scalar_prefetch=0,
                grid=grid,
                in_specs=in_specs,
                out_specs=out_specs,
            ),
            compiler_params=pltpu.CompilerParams(
                dimension_semantics=("parallel",),  # row tiles shard across TCs (v7x)
                vmem_limit_bytes=vmem_limit,
            ),
        )(x, w1, b1, w2, b2)

    try:
        # Single-buffer the constant-index resident weights/biases (halves their VMEM).
        out = _run(pl.Buffered(1))
    except Exception:
        # Older/stricter jax: fall back to default pipelining for the weight blocks.
        out = _run(None)

    return out[:, :feat_dim] if pad_feat else out


def _ref_forward(x, w1, b1, w2, b2):
    h = jnp.maximum(x @ w1 + jnp.reshape(b1, (1, -1)), 0.0)
    f = h @ w2 + jnp.reshape(b2, (1, -1))
    norm = jnp.sqrt(jnp.sum(f * f, axis=1, keepdims=True))
    return f / jnp.maximum(norm, 1e-12)


if __name__ == "__main__":
    # Shapes implied by the module: x is (batch, dim_in); head maps dim_in -> dim_in -> feat_dim.
    # N chosen so the row grid has multiple steps with a ragged last tile.
    N, dim_in, feat_dim = 200, 32, 16
    key = jax.random.PRNGKey(0)
    kx, k1, k2 = jax.random.split(key, 3)

    x = jax.random.normal(kx, (N, dim_in), dtype=jnp.float32)

    # Deterministic synthetic params (c2_xavier_fill ~ uniform; exact init values are not
    # semantically relevant, only shapes/dtypes). Weights stored pre-transposed vs. nn.Linear.
    limit1 = (6.0 / (dim_in + dim_in)) ** 0.5
    w1 = jax.random.uniform(k1, (dim_in, dim_in), jnp.float32, -limit1, limit1)
    b1 = jnp.zeros((dim_in,), jnp.float32)
    limit2 = (6.0 / (dim_in + feat_dim)) ** 0.5
    w2 = jax.random.uniform(k2, (dim_in, feat_dim), jnp.float32, -limit2, limit2)
    b2 = jnp.zeros((feat_dim,), jnp.float32)

    out = contrastive_encoder(x, w1, b1, w2, b2)
    out = jax.block_until_ready(out)

    ref = _ref_forward(x, w1, b1, w2, b2)
    assert out.shape == (N, feat_dim)
    assert bool(jnp.allclose(out, ref, atol=1e-5, rtol=1e-5)), "mismatch vs. pure-JAX reference"

    print("KERNEL_OK")
</pallas_src>

<mosaic_0001>
module attributes {stable_mosaic.version = 11 : i64} {
  func.func @_encoder_kernel(%arg0: i32, %arg1: memref<32x32xf32, #tpu.memory_space<vmem>>, %arg2: memref<32x32xf32, #tpu.memory_space<vmem>>, %arg3: memref<1x32xf32, #tpu.memory_space<vmem>>, %arg4: memref<32x16xf32, #tpu.memory_space<vmem>>, %arg5: memref<1x16xf32, #tpu.memory_space<vmem>>, %arg6: memref<32x16xf32, #tpu.memory_space<vmem>>) attributes {dimension_semantics = [#tpu.dimension_semantics<parallel>], iteration_bounds = array<i64: 7>, scalar_prefetch = 0 : i64, scratch_operands = 0 : i64, tpu.core_type = #tpu.core_type<tc>, window_params = [{transform_indices = @transform_0, window_bounds = array<i64: 32, 32>}, {pipeline_mode = #tpu.pipeline_mode<synchronous>, transform_indices = @transform_1, window_bounds = array<i64: 32, 32>}, {pipeline_mode = #tpu.pipeline_mode<synchronous>, transform_indices = @transform_2, window_bounds = array<i64: 1, 32>}, {pipeline_mode = #tpu.pipeline_mode<synchronous>, transform_indices = @transform_3, window_bounds = array<i64: 32, 16>}, {pipeline_mode = #tpu.pipeline_mode<synchronous>, transform_indices = @transform_4, window_bounds = array<i64: 1, 16>}, {transform_indices = @transform_5, window_bounds = array<i64: 32, 16>}]} {
    %c0 = arith.constant 0 : index
    %c0_0 = arith.constant 0 : index
    %0 = vector.load %arg1[%c0, %c0_0] : memref<32x32xf32, #tpu.memory_space<vmem>>, vector<32x32xf32>
    %c0_1 = arith.constant 0 : index
    %c0_2 = arith.constant 0 : index
    %1 = vector.load %arg2[%c0_1, %c0_2] : memref<32x32xf32, #tpu.memory_space<vmem>>, vector<32x32xf32>
    %cst = arith.constant dense<0.000000e+00> : vector<32x32xf32>
    %2 = tpu.matmul %0, %1, %cst {dimension_numbers = #tpu.dot_dimension_numbers<[1], [0], [0], [1], [0, 0, 1, 1], [], []>} : vector<32x32xf32>, vector<32x32xf32>, vector<32x32xf32> -> vector<32x32xf32>
    %c0_3 = arith.constant 0 : index
    %c0_4 = arith.constant 0 : index
    %3 = vector.load %arg3[%c0_3, %c0_4] : memref<1x32xf32, #tpu.memory_space<vmem>>, vector<1x32xf32>
    %4 = vector.broadcast %3 : vector<1x32xf32> to vector<32x32xf32>
    %5 = arith.addf %2, %4 : vector<32x32xf32>
    %cst_5 = arith.constant 0.000000e+00 : f32
    %6 = vector.broadcast %cst_5 : f32 to vector<32x32xf32>
    %7 = arith.maximumf %5, %6 : vector<32x32xf32>
    %c0_6 = arith.constant 0 : index
    %c0_7 = arith.constant 0 : index
    %8 = vector.load %arg4[%c0_6, %c0_7] : memref<32x16xf32, #tpu.memory_space<vmem>>, vector<32x16xf32>
    %cst_8 = arith.constant dense<0.000000e+00> : vector<32x16xf32>
    %9 = tpu.matmul %7, %8, %cst_8 {dimension_numbers = #tpu.dot_dimension_numbers<[1], [0], [0], [1], [0, 0, 1, 1], [], []>} : vector<32x32xf32>, vector<32x16xf32>, vector<32x16xf32> -> vector<32x16xf32>
    %c0_9 = arith.constant 0 : index
    %c0_10 = arith.constant 0 : index
    %10 = vector.load %arg5[%c0_9, %c0_10] : memref<1x16xf32, #tpu.memory_space<vmem>>, vector<1x16xf32>
    %11 = vector.broadcast %10 : vector<1x16xf32> to vector<32x16xf32>
    %12 = arith.addf %9, %11 : vector<32x16xf32>
    %13 = arith.mulf %12, %12 : vector<32x16xf32>
    %cst_11 = arith.constant dense<0.000000e+00> : vector<32xf32>
    %14 = vector.multi_reduction <add>, %13, %cst_11 [1] : vector<32x16xf32> to vector<32xf32>
    %15 = vector.shape_cast %14 : vector<32xf32> to vector<32x1xf32>
    %cst_12 = arith.constant 1.000000e-24 : f32
    %16 = vector.broadcast %cst_12 : f32 to vector<32x1xf32>
    %17 = arith.maximumf %15, %16 : vector<32x1xf32>
    %18 = math.rsqrt %17 : vector<32x1xf32>
    %19 = vector.broadcast %18 : vector<32x1xf32> to vector<32x16xf32>
    %20 = arith.mulf %12, %19 : vector<32x16xf32>
    %c0_13 = arith.constant 0 : index
    %c0_14 = arith.constant 0 : index
    %21 = vector.load %arg6[%c0_13, %c0_14] : memref<32x16xf32, #tpu.memory_space<vmem>>, vector<32x16xf32>
    tpu.vector_store %arg6[%c0_13, %c0_14], %20 {strides = array<i32>} : memref<32x16xf32, #tpu.memory_space<vmem>>, vector<32x16xf32>,
    return
  }
  func.func @transform_0(%arg0: i32) -> (i32, i32) {
    %c0_i32 = arith.constant 0 : i32
    %c0_i32_0 = arith.constant 0 : i32
    return %arg0, %c0_i32 : i32, i32
  }
  func.func @transform_1(%arg0: i32) -> (i32, i32) {
    %c0_i32 = arith.constant 0 : i32
    %c0_i32_0 = arith.constant 0 : i32
    %c0_i32_1 = arith.constant 0 : i32
    return %c0_i32, %c0_i32_0 : i32, i32
  }
  func.func @transform_2(%arg0: i32) -> (i32, i32) {
    %c0_i32 = arith.constant 0 : i32
    %c0_i32_0 = arith.constant 0 : i32
    %c0_i32_1 = arith.constant 0 : i32
    return %c0_i32, %c0_i32_0 : i32, i32
  }
  func.func @transform_3(%arg0: i32) -> (i32, i32) {
    %c0_i32 = arith.constant 0 : i32
    %c0_i32_0 = arith.constant 0 : i32
    %c0_i32_1 = arith.constant 0 : i32
    return %c0_i32, %c0_i32_0 : i32, i32
  }
  func.func @transform_4(%arg0: i32) -> (i32, i32) {
    %c0_i32 = arith.constant 0 : i32
    %c0_i32_0 = arith.constant 0 : i32
    %c0_i32_1 = arith.constant 0 : i32
    return %c0_i32, %c0_i32_0 : i32, i32
  }
  func.func @transform_5(%arg0: i32) -> (i32, i32) {
    %c0_i32 = arith.constant 0 : i32
    %c0_i32_0 = arith.constant 0 : i32
    return %arg0, %c0_i32 : i32, i32
  }
}

module attributes {stable_mosaic.version = 11 : i64} {
  func.func @_encoder_kernel(%arg0: i32, %arg1: memref<32x32xf32, #tpu.memory_space<vmem>>, %arg2: memref<32x32xf32, #tpu.memory_space<vmem>>, %arg3: memref<1x32xf32, #tpu.memory_space<vmem>>, %arg4: memref<32x16xf32, #tpu.memory_space<vmem>>, %arg5: memref<1x16xf32, #tpu.memory_space<vmem>>, %arg6: memref<32x16xf32, #tpu.memory_space<vmem>>) attributes {dimension_semantics = [#tpu.dimension_semantics<parallel>], iteration_bounds = array<i64: 7>, scalar_prefetch = 0 : i64, scratch_operands = 0 : i64, tpu.core_type = #tpu.core_type<tc>, window_params = [{transform_indices = @transform_0, window_bounds = array<i64: 32, 32>}, {pipeline_mode = #tpu.pipeline_mode<synchronous>, transform_indices = @transform_1, window_bounds = array<i64: 32, 32>}, {pipeline_mode = #tpu.pipeline_mode<synchronous>, transform_indices = @transform_2, window_bounds = array<i64: 1, 32>}, {pipeline_mode = #tpu.pipeline_mode<synchronous>, transform_indices = @transform_3, window_bounds = array<i64: 32, 16>}, {pipeline_mode = #tpu.pipeline_mode<synchronous>, transform_indices = @transform_4, window_bounds = array<i64: 1, 16>}, {transform_indices = @transform_5, window_bounds = array<i64: 32, 16>}]} {
    %c0 = arith.constant 0 : index
    %c0_0 = arith.constant 0 : index
    %0 = vector.load %arg1[%c0, %c0_0] : memref<32x32xf32, #tpu.memory_space<vmem>>, vector<32x32xf32>
    %c0_1 = arith.constant 0 : index
    %c0_2 = arith.constant 0 : index
    %1 = vector.load %arg2[%c0_1, %c0_2] : memref<32x32xf32, #tpu.memory_space<vmem>>, vector<32x32xf32>
    %cst = arith.constant dense<0.000000e+00> : vector<32x32xf32>
    %2 = tpu.matmul %0, %1, %cst {dimension_numbers = #tpu.dot_dimension_numbers<[1], [0], [0], [1], [0, 0, 1, 1], [], []>} : vector<32x32xf32>, vector<32x32xf32>, vector<32x32xf32> -> vector<32x32xf32>
    %c0_3 = arith.constant 0 : index
    %c0_4 = arith.constant 0 : index
    %3 = vector.load %arg3[%c0_3, %c0_4] : memref<1x32xf32, #tpu.memory_space<vmem>>, vector<1x32xf32>
    %4 = vector.broadcast %3 : vector<1x32xf32> to vector<32x32xf32>
    %5 = arith.addf %2, %4 : vector<32x32xf32>
    %cst_5 = arith.constant 0.000000e+00 : f32
    %6 = vector.broadcast %cst_5 : f32 to vector<32x32xf32>
    %7 = arith.maximumf %5, %6 : vector<32x32xf32>
    %c0_6 = arith.constant 0 : index
    %c0_7 = arith.constant 0 : index
    %8 = vector.load %arg4[%c0_6, %c0_7] : memref<32x16xf32, #tpu.memory_space<vmem>>, vector<32x16xf32>
    %cst_8 = arith.constant dense<0.000000e+00> : vector<32x16xf32>
    %9 = tpu.matmul %7, %8, %cst_8 {dimension_numbers = #tpu.dot_dimension_numbers<[1], [0], [0], [1], [0, 0, 1, 1], [], []>} : vector<32x32xf32>, vector<32x16xf32>, vector<32x16xf32> -> vector<32x16xf32>
    %c0_9 = arith.constant 0 : index
    %c0_10 = arith.constant 0 : index
    %10 = vector.load %arg5[%c0_9, %c0_10] : memref<1x16xf32, #tpu.memory_space<vmem>>, vector<1x16xf32>
    %11 = vector.broadcast %10 : vector<1x16xf32> to vector<32x16xf32>
    %12 = arith.addf %9, %11 : vector<32x16xf32>
    %13 = arith.mulf %12, %12 : vector<32x16xf32>
    %cst_11 = arith.constant dense<0.000000e+00> : vector<32xf32>
    %14 = vector.multi_reduction <add>, %13, %cst_11 [1] : vector<32x16xf32> to vector<32xf32>
    %15 = vector.shape_cast %14 : vector<32xf32> to vector<32x1xf32>
    %cst_12 = arith.constant 1.000000e-24 : f32
    %16 = vector.broadcast %cst_12 : f32 to vector<32x1xf32>
    %17 = arith.maximumf %15, %16 : vector<32x1xf32>
    %18 = math.rsqrt %17 : vector<32x1xf32>
    %19 = vector.broadcast %18 : vector<32x1xf32> to vector<32x16xf32>
    %20 = arith.mulf %12, %19 : vector<32x16xf32>
    %c0_13 = arith.constant 0 : index
    %c0_14 = arith.constant 0 : index
    %21 = vector.load %arg6[%c0_13, %c0_14] : memref<32x16xf32, #tpu.memory_space<vmem>>, vector<32x16xf32>
    tpu.vector_store %arg6[%c0_13, %c0_14], %20 {strides = array<i32>} : memref<32x16xf32, #tpu.memory_space<vmem>>, vector<32x16xf32>,
    return
  }
  func.func @transform_0(%arg0: i32) -> (i32, i32) {
    %c0_i32 = arith.constant 0 : i32
    %c0_i32_0 = arith.constant 0 : i32
    return %arg0, %c0_i32 : i32, i32
  }
  func.func @transform_1(%arg0: i32) -> (i32, i32) {
    %c0_i32 = arith.constant 0 : i32
    %c0_i32_0 = arith.constant 0 : i32
    %c0_i32_1 = arith.constant 0 : i32
    return %c0_i32, %c0_i32_0 : i32, i32
  }
  func.func @transform_2(%arg0: i32) -> (i32, i32) {
    %c0_i32 = arith.constant 0 : i32
    %c0_i32_0 = arith.constant 0 : i32
    %c0_i32_1 = arith.constant 0 : i32
    return %c0_i32, %c0_i32_0 : i32, i32
  }
  func.func @transform_3(%arg0: i32) -> (i32, i32) {
    %c0_i32 = arith.constant 0 : i32
    %c0_i32_0 = arith.constant 0 : i32
    %c0_i32_1 = arith.constant 0 : i32
    return %c0_i32, %c0_i32_0 : i32, i32
  }
  func.func @transform_4(%arg0: i32) -> (i32, i32) {
    %c0_i32 = arith.constant 0 : i32
    %c0_i32_0 = arith.constant 0 : i32
    %c0_i32_1 = arith.constant 0 : i32
    return %c0_i32, %c0_i32_0 : i32, i32
  }
  func.func @transform_5(%arg0: i32) -> (i32, i32) {
    %c0_i32 = arith.constant 0 : i32
    %c0_i32_0 = arith.constant 0 : i32
    return %arg0, %c0_i32 : i32, i32
  }
}

</mosaic_0001>

<llo_original>
// kernel: tpu_custom_call.1
$region0: #{tpu_custom_call.1}
  #allocation0 [shape = 'u32[]', space=smem, size = 0x4, offset = 0x4, fixed_abs, tag = 'smem constant byte address 0x4 - core index']
  #allocation1 [shape = 'u32[144,128]{1,0:T(1,128)}', space=vmem, size = 0x12000, scoped, tag = 'internal scratch']
  %s0 = inlined_call_operand.vmem [shape: f32[200,32], index: 0, kind: input, shape index: {}]
  %s1 = inlined_call_operand.vmem [shape: f32[32,32], index: 1, kind: input, shape index: {}]
  %s2 = inlined_call_operand.vmem [shape: f32[1,32], index: 2, kind: input, shape index: {}]
  %s3 = inlined_call_operand.vmem [shape: f32[32,16], index: 3, kind: input, shape index: {}]
  %s4 = inlined_call_operand.vmem [shape: f32[1,16], index: 4, kind: input, shape index: {}]
  %s5 = inlined_call_operand.vmem [shape: f32[200,16], index: 5, kind: output, shape index: {}]
  %s6 = sld [smem:[#allocation0]]
  $region101: #{tpu_custom_call.1} parent=0
    _
  %s8 = ssub.s32 1, %s6
  %s9 = scalar_select 0, %s8, %s6
  $region1: #{tpu_custom_call.1} parent=0
    #allocation2 [shape = 'u8[32768]{0}', space=vmem, size = 0x8000, scoped, tag = 'output window, operand 0']
    loop: start=0, step=1, limit=9
    $region2: #{tpu_custom_call.1} parent=1 // loop_pre_header
      _
    $region3: #{tpu_custom_call.1} parent=1 // loop_header
      %s11 = sphi 0, %s15
      %p12 = scmp.ge.s32.totalorder %s11, 9
      %s21 = sphi 0, %s23
      %s24 = sphi 0, %s21
      %s25 = sphi 0, %s24
      %s41 = sphi 0, %s25
      %s45 = sphi 0, %s45
      %s47 = sphi 0, %s45
      %s48 = sphi 0, %s47
      %s62 = sphi 0, %s48
      %s66 = sphi 0, %s66
      %s68 = sphi 0, %s66
      %s69 = sphi 0, %s68
      %s83 = sphi 0, %s69
      %s87 = sphi 0, %s87
      %s89 = sphi 0, %s87
      %s90 = sphi 0, %s89
      %s104 = sphi 0, %s90
      %s108 = sphi 0, %s108
      %s110 = sphi 0, %s108
      %s111 = sphi 0, %s110
      %s125 = sphi 0, %s111
      %s131 = sphi 0, %s133
      %s134 = sphi 0, %s131
      %s135 = sphi 0, %s134
      %s151 = sphi 0, %s135
    $region4: #{tpu_custom_call.1} parent=1 // loop_header_branch
      %14 = sbr.rel (%p12) target = $region8
    $region5: #{tpu_custom_call.1} parent=1 // loop_body
      %s16 = ssub.s32 %s11, 1
      %s17 = ssub.s32 %s11, 2
      %s18 = sadd.s32 %s11, 1
      %s19 = ssub.s32 %s11, %s18
      %p20 = scmp.eq.s32.totalorder %s19, 0
      %s22 = sadd.s32 %s21, 1
      %s23 = scalar_select %p20, %s21, %s22
      %p26 = pneg %p20
      %p27 = scmp.eq.s32.totalorder %s11, 6
      %p28 = por %p26, %p27
      %p29 = scmp.ne.s32.totalorder %s21, %s24
      %p30 = scmp.eq.s32.totalorder %s11, 0
      %p31 = por %p29, %p30
      %p32 = scmp.ne.s32.totalorder %s21, %s24
      %p33 = scmp.eq.s32.totalorder %s16, 6
      %p34 = por %p32, %p33
      %p35 = scmp.ne.s32.totalorder %s24, %s25
      %p36 = scmp.eq.s32.totalorder %s16, 0
      %p37 = por %p35, %p36
      %p38 = scmp.ne.s32.totalorder %s24, %s25
      %p39 = scmp.eq.s32.totalorder %s17, 6
      %p40 = por %p38, %p39
      %p42 = scmp.ne.s32.totalorder %s25, %s41
      %p43 = scmp.eq.s32.totalorder %s17, 0
      %p44 = por %p42, %p43
      %s46 = sadd.s32 %s45, 1
      %p49 = scmp.eq.s32.totalorder %s11, 6
      %p50 = scmp.ne.s32.totalorder %s45, %s47
      %p51 = scmp.eq.s32.totalorder %s11, 0
      %p52 = por %p50, %p51
      %p53 = scmp.ne.s32.totalorder %s45, %s47
      %p54 = scmp.eq.s32.totalorder %s16, 6
      %p55 = por %p53, %p54
      %p56 = scmp.ne.s32.totalorder %s47, %s48
      %p57 = scmp.eq.s32.totalorder %s16, 0
      %p58 = por %p56, %p57
      %p59 = scmp.ne.s32.totalorder %s47, %s48
      %p60 = scmp.eq.s32.totalorder %s17, 6
      %p61 = por %p59, %p60
      %p63 = scmp.ne.s32.totalorder %s48, %s62
      %p64 = scmp.eq.s32.totalorder %s17, 0
      %p65 = por %p63, %p64
      %s67 = sadd.s32 %s66, 1
      %p70 = scmp.eq.s32.totalorder %s11, 6
      %p71 = scmp.ne.s32.totalorder %s66, %s68
      %p72 = scmp.eq.s32.totalorder %s11, 0
      %p73 = por %p71, %p72
      %p74 = scmp.ne.s32.totalorder %s66, %s68
      %p75 = scmp.eq.s32.totalorder %s16, 6
      %p76 = por %p74, %p75
      %p77 = scmp.ne.s32.totalorder %s68, %s69
      %p78 = scmp.eq.s32.totalorder %s16, 0
      %p79 = por %p77, %p78
      %p80 = scmp.ne.s32.totalorder %s68, %s69
      %p81 = scmp.eq.s32.totalorder %s17, 6
      %p82 = por %p80, %p81
      %p84 = scmp.ne.s32.totalorder %s69, %s83
      %p85 = scmp.eq.s32.totalorder %s17, 0
      %p86 = por %p84, %p85
      %s88 = sadd.s32 %s87, 1
      %p91 = scmp.eq.s32.totalorder %s11, 6
      %p92 = scmp.ne.s32.totalorder %s87, %s89
      %p93 = scmp.eq.s32.totalorder %s11, 0
      %p94 = por %p92, %p93
      %p95 = scmp.ne.s32.totalorder %s87, %s89
      %p96 = scmp.eq.s32.totalorder %s16, 6
      %p97 = por %p95, %p96
      %p98 = scmp.ne.s32.totalorder %s89, %s90
      %p99 = scmp.eq.s32.totalorder %s16, 0
      %p100 = por %p98, %p99
      %p101 = scmp.ne.s32.totalorder %s89, %s90
      %p102 = scmp.eq.s32.totalorder %s17, 6
      %p103 = por %p101, %p102
      %p105 = scmp.ne.s32.totalorder %s90, %s104
      %p106 = scmp.eq.s32.totalorder %s17, 0
      %p107 = por %p105, %p106
      %s109 = sadd.s32 %s108, 1
      %p112 = scmp.eq.s32.totalorder %s11, 6
      %p113 = scmp.ne.s32.totalorder %s108, %s110
      %p114 = scmp.eq.s32.totalorder %s11, 0
      %p115 = por %p113, %p114
      %p116 = scmp.ne.s32.totalorder %s108, %s110
      %p117 = scmp.eq.s32.totalorder %s16, 6
      %p118 = por %p116, %p117
      %p119 = scmp.ne.s32.totalorder %s110, %s111
      %p120 = scmp.eq.s32.totalorder %s16, 0
      %p121 = por %p119, %p120
      %p122 = scmp.ne.s32.totalorder %s110, %s111
      %p123 = scmp.eq.s32.totalorder %s17, 6
      %p124 = por %p122, %p123
      %p126 = scmp.ne.s32.totalorder %s111, %s125
      %p127 = scmp.eq.s32.totalorder %s17, 0
      %p128 = por %p126, %p127
      %s129 = ssub.s32 %s11, %s18
      %p130 = scmp.eq.s32.totalorder %s129, 0
      %s132 = sadd.s32 %s131, 1
      %s133 = scalar_select %p130, %s131, %s132
      %p136 = pneg %p130
      %p137 = scmp.eq.s32.totalorder %s11, 6
      %p138 = por %p136, %p137
      %p139 = scmp.ne.s32.totalorder %s131, %s134
      %p140 = scmp.eq.s32.totalorder %s11, 0
      %p141 = por %p139, %p140
      %p142 = scmp.ne.s32.totalorder %s131, %s134
      %p143 = scmp.eq.s32.totalorder %s16, 6
      %p144 = por %p142, %p143
      %p145 = scmp.ne.s32.totalorder %s134, %s135
      %p146 = scmp.eq.s32.totalorder %s16, 0
      %p147 = por %p145, %p146
      %p148 = scmp.ne.s32.totalorder %s134, %s135
      %p149 = scmp.eq.s32.totalorder %s17, 6
      %p150 = por %p148, %p149
      %p152 = scmp.ne.s32.totalorder %s135, %s151
      %p153 = scmp.eq.s32.totalorder %s17, 0
      %p154 = por %p152, %p153
      %p155 = scmp.le.s32.totalorder 1, %s11
      %p156 = scmp.lt.s32.totalorder %s11, 8
      %p157 = pnand %p155, %p156
      %p158 = pneg %p157
      // Predicated region
      $region9: #{tpu_custom_call.1} parent=5 // pred_check
        _
      $region10: #{tpu_custom_call.1} parent=5 // pred_check_branch
        %160 = sbr.rel (%p157) target = $region12
      $region11: #{tpu_custom_call.1} parent=5 // pred_region
        %s161 = ssub.s32 %s11, 1
        // Predicated region
        $region13: #{tpu_custom_call.1} parent=11 // pred_check
          %p162 = pneg %p58
        $region14: #{tpu_custom_call.1} parent=11 // pred_check_branch
          %164 = sbr.rel (%p162) target = $region16
        $region15: #{tpu_custom_call.1} parent=11 // pred_region
          _
        $region16: #{tpu_custom_call.1} parent=11 // pred_fallthru
          _
        // Predicated region
        $region17: #{tpu_custom_call.1} parent=11 // pred_check
          %p165 = pneg %p79
        $region18: #{tpu_custom_call.1} parent=11 // pred_check_branch
          %167 = sbr.rel (%p165) target = $region20
        $region19: #{tpu_custom_call.1} parent=11 // pred_region
          _
        $region20: #{tpu_custom_call.1} parent=11 // pred_fallthru
          _
        // Predicated region
        $region21: #{tpu_custom_call.1} parent=11 // pred_check
          %p168 = pneg %p100
        $region22: #{tpu_custom_call.1} parent=11 // pred_check_branch
          %170 = sbr.rel (%p168) target = $region24
        $region23: #{tpu_custom_call.1} parent=11 // pred_region
          _
        $region24: #{tpu_custom_call.1} parent=11 // pred_fallthru
          _
        // Predicated region
        $region25: #{tpu_custom_call.1} parent=11 // pred_check
          %p171 = pneg %p121
        $region26: #{tpu_custom_call.1} parent=11 // pred_check_branch
          %173 = sbr.rel (%p171) target = $region28
        $region27: #{tpu_custom_call.1} parent=11 // pred_region
          _
        $region28: #{tpu_custom_call.1} parent=11 // pred_fallthru
          _
      $region12: #{tpu_custom_call.1} parent=5 // pred_fallthru
        _
      %p174 = scmp.lt.s32.totalorder %s11, 7
      // Predicated region
      $region29: #{tpu_custom_call.1} parent=5 // pred_check
        %p175 = pneg %p174
      $region30: #{tpu_custom_call.1} parent=5 // pred_check_branch
        %177 = sbr.rel (%p175) target = $region32
      $region31: #{tpu_custom_call.1} parent=5 // pred_region
        // Predicated region
        $region33: #{tpu_custom_call.1} parent=31 // pred_check
          %p178 = pneg %p31
        $region34: #{tpu_custom_call.1} parent=31 // pred_check_branch
          %180 = sbr.rel (%p178) target = $region36
        $region35: #{tpu_custom_call.1} parent=31 // pred_region
          %s181 = smul.u32 4, %s11
          %s182 = ssub.s32 25, %s181
          %p183 = scmp.lt.s32.totalorder %s182, 4
          %s184 = scalar_select %p183, %s182, 4
          %s185 = smul.u32 128, %s184
          %p186 = scmp.lt.s32.totalorder %s181, 24
          %s187 = scalar_select %p186, %s181, 24
          %s188 = smul.addr %s187, 8
          %s189 = scalar_lea.vmem %s0, %s188
          %s190 = smul.u32 4, %s11
          %s191 = ssub.s32 25, %s190
          %p192 = scmp.lt.s32.totalorder %s191, 4
          %s193 = scalar_select %p192, %s191, 4
          %s194 = smul.u32 128, %s193
        $region36: #{tpu_custom_call.1} parent=31 // pred_fallthru
          _
      $region32: #{tpu_custom_call.1} parent=5 // pred_fallthru
        _
      %p195 = scmp.le.s32.totalorder 1, %s11
      %p196 = scmp.lt.s32.totalorder %s11, 8
      %p197 = pnand %p195, %p196
      %p198 = pneg %p197
      // Predicated region
      $region37: #{tpu_custom_call.1} parent=5 // pred_check
        _
      $region38: #{tpu_custom_call.1} parent=5 // pred_check_branch
        %200 = sbr.rel (%p197) target = $region40
      $region39: #{tpu_custom_call.1} parent=5 // pred_region
        %s201 = ssub.s32 %s11, 1
        %s202 = smul.u32 4, %s16
        %s203 = ssub.s32 25, %s202
        %p204 = scmp.lt.s32.totalorder %s203, 4
        %s205 = scalar_select %p204, %s203, 4
        %s206 = smul.u32 128, %s205
        %p207 = scmp.lt.s32.totalorder %s202, 24
        %s208 = scalar_select %p207, %s202, 24
        %s209 = smul.addr %s208, 8
        %s210 = scalar_lea.vmem %s0, %s209
        %p211 = pneg %p37
        %p212 = pneg %p34
        %p213 = pneg %p58
        %p214 = pneg %p55
        %p215 = pneg %p79
        %p216 = pneg %p76
        %p217 = pneg %p100
        %p218 = pneg %p97
        %p219 = pneg %p121
        %p220 = pneg %p118
        %p221 = pneg %p147
        %p222 = pneg %p144
        %s223 = sand.u32 %s134, 1
        %s224 = sand.u32 %s134, 1
        %s225 = smul.addr %s224, 32
        %s226 = scalar_lea.vmem [#allocation2], %s225
        %s227 = smul.u32 4, %s16
        %s228 = ssub.s32 25, %s227
        %p229 = scmp.lt.s32.totalorder %s228, 4
        %s230 = scalar_select %p229, %s228, 4
        %s231 = smul.u32 128, %s230
        %p232 = scmp.lt.s32.totalorder %s227, 24
        %s233 = scalar_select %p232, %s227, 24
        %s234 = smul.addr %s233, 8
        %s235 = scalar_lea.vmem %s0, %s234
        %s236 = smul.u32 4, %s16
        %s237 = ssub.s32 25, %s236
        %p238 = scmp.lt.s32.totalorder %s237, 4
        %s239 = scalar_select %p238, %s237, 4
        %s240 = smul.u32 128, %s239
        %s241 = smul.u32 4, %s16
        %s242 = ssub.s32 25, %s241
        %p243 = scmp.lt.s32.totalorder %s242, 4
        %s244 = scalar_select %p243, %s242, 4
        %s245 = smul.u32 128, %s244
        %v246 = vld [vmem:[%s235] sm:$0xff]
        %v247 = vld [vmem:[%s235 + $0x8] sm:$0xff]
        %v248 = vld [vmem:[%s235 + $0x10] sm:$0xff]
        %v249 = vld [vmem:[%s235 + $0x18] sm:$0xff]
        %v250 = vld [vmem:[%s1] sm:$0xff]
        %v251 = vld [vmem:[%s1 + $0x8] sm:$0xff]
        %v252 = vld [vmem:[%s1 + $0x10] sm:$0xff]
        %v253 = vld [vmem:[%s1 + $0x18] sm:$0xff]
        %v254 = vld [vmem:[%s2] sm:$0x1]
        %v256 = vlaneseq
        %v257 = vshrl.u32 %v256, 7
        %v258 = vsub.s32 0, %v257
        %v259 = vrot.slane %v254, %v258
        %vm261 = vcmask 261120
        %v263 = vsel %vm261, %v246, 0
        %v266 = vsel %vm261, %v247, 0
        %v269 = vsel %vm261, %v248, 0
        %v272 = vsel %vm261, %v249, 0
        %274 = vmatprep.subr.mxu0 0.0
        %275 = vmatpush1.msra.mxu0 0.0
        %276 = vmatprep.subr.mxu0 0.0
        %277 = vmatpush1.msra.mxu0 0.0
        %278 = vmatprep.subr.mxu0 0.0
        %279 = vmatpush1.msra.mxu0 0.0
        %280 = vmatprep.subr.mxu0 0.0
        %281 = vmatpush1.msra.mxu0 0.0
        %282 = vmatprep.subr.mxu0 0.0
        %283 = vmatpush1.msra.mxu0 0.0
        %284 = vmatprep.subr.mxu0 0.0
        %285 = vmatpush1.msra.mxu0 0.0
        %286 = vmatprep.subr.mxu0 0.0
        %287 = vmatpush1.msra.mxu0 0.0
        %288 = vmatprep.subr.mxu0 0.0
        %289 = vmatpush1.msra.mxu0 0.0
        %290 = vmatprep.subr.mxu0 0.0
        %291 = vmatpush1.msra.mxu0 0.0
        %292 = vmatprep.subr.mxu0 0.0
        %293 = vmatpush1.msra.mxu0 0.0
        %294 = vmatprep.subr.mxu0 0.0
        %295 = vmatpush1.msra.mxu0 0.0
        %296 = vmatprep.subr.mxu0 0.0
        %297 = vmatpush1.msra.mxu0 0.0
        %298 = vmatprep.subr.mxu0 0.0
        %299 = vmatpush1.msra.mxu0 %v253
        %300 = vmatprep.subr.mxu0 0.0
        %301 = vmatpush1.msra.mxu0 %v252
        %302 = vmatprep.subr.mxu0 0.0
        %303 = vmatpush1.msra.mxu0 %v251
        %304 = vmatprep.subr.mxu0 0.0
        %305 = vmatpush1.msra.mxu0 %v250
        %306 = vmatprep.subr.mxu0 0.0
        %307 = vmatpush2.msra.mxu0 0.0
        %308 = vmatprep.subr.mxu0 0.0
        %309 = vmatpush2.msra.mxu0 0.0
        %310 = vmatprep.subr.mxu0 0.0
        %311 = vmatpush2.msra.mxu0 0.0
        %312 = vmatprep.subr.mxu0 0.0
        %313 = vmatpush2.msra.mxu0 0.0
        %314 = vmatprep.subr.mxu0 0.0
        %315 = vmatpush2.msra.mxu0 0.0
        %316 = vmatprep.subr.mxu0 0.0
        %317 = vmatpush2.msra.mxu0 0.0
        %318 = vmatprep.subr.mxu0 0.0
        %319 = vmatpush2.msra.mxu0 0.0
        %320 = vmatprep.subr.mxu0 0.0
        %321 = vmatpush2.msra.mxu0 0.0
        %322 = vmatprep.subr.mxu0 0.0
        %323 = vmatpush2.msra.mxu0 0.0
        %324 = vmatprep.subr.mxu0 0.0
        %325 = vmatpush2.msra.mxu0 0.0
        %326 = vmatprep.subr.mxu0 0.0
        %327 = vmatpush2.msra.mxu0 0.0
        %328 = vmatprep.subr.mxu0 0.0
        %329 = vmatpush2.msra.mxu0 0.0
        %330 = vmatprep.subr.mxu0 0.0
        %331 = vmatpush2.msra.mxu0 0.0
        %332 = vmatprep.subr.mxu0 0.0
        %333 = vmatpush2.msra.mxu0 0.0
        %334 = vmatprep.subr.mxu0 0.0
        %335 = vmatpush2.msra.mxu0 0.0
        %336 = vmatprep.subr.mxu0 0.0
        %337 = vmatpush2.msra.mxu0 0.0
        %338 = vmatprep.mubr.f32.mxu0 0.0
        %339 = vmatmul.mubr.f32.gmra.mxu0 %v263
        %v340 = vpop.f32.mrf.mxu0
        %v341 = vadd.f32 %v259, %v340
        %v342 = vpop.f32.mrf.mxu0
        %343 = vmatprep.mubr.f32.mxu0 0.0
        %344 = vmatmul.mubr.f32.gmra.mxu0 %v266
        %v345 = vpop.f32.mrf.mxu0
        %v346 = vadd.f32 %v259, %v345
        %v347 = vpop.f32.mrf.mxu0
        %348 = vmatprep.mubr.f32.mxu0 0.0
        %349 = vmatmul.mubr.f32.gmra.mxu0 %v269
        %v350 = vpop.f32.mrf.mxu0
        %v351 = vadd.f32 %v259, %v350
        %v352 = vpop.f32.mrf.mxu0
        %353 = vmatprep.mubr.f32.mxu0 0.0
        %354 = vmatmul.mubr.f32.gmra.mxu0 %v272
        %v355 = vpop.f32.mrf.mxu0
        %v356 = vadd.f32 %v259, %v355
        %v357 = vpop.f32.mrf.mxu0
        %358 = vdwg.mxu0
        %v359 = vmax.f32 %v341, 0.0
        %v360 = vmax.f32 %v346, 0.0
        %v361 = vmax.f32 %v351, 0.0
        %v362 = vmax.f32 %v356, 0.0
        %v363 = vld [vmem:[%s3] sm:$0xff]
        %v364 = vld [vmem:[%s3 + $0x8] sm:$0xff]
        %v365 = vld [vmem:[%s3 + $0x10] sm:$0xff]
        %v366 = vld [vmem:[%s3 + $0x18] sm:$0xff]
        %v367 = vld [vmem:[%s4] sm:$0x1]
        %v369 = vlaneseq
        %v370 = vshrl.u32 %v369, 7
        %v371 = vsub.s32 0, %v370
        %v372 = vrot.slane %v367, %v371
        %v375 = vsel %vm261, %v359, 0
        %v378 = vsel %vm261, %v360, 0
        %v381 = vsel %vm261, %v361, 0
        %v384 = vsel %vm261, %v362, 0
        %386 = vmatprep.subr.mxu0 0.0
        %387 = vmatpush1.msra.mxu0 0.0
        %388 = vmatprep.subr.mxu0 0.0
        %389 = vmatpush1.msra.mxu0 0.0
        %390 = vmatprep.subr.mxu0 0.0
        %391 = vmatpush1.msra.mxu0 0.0
        %392 = vmatprep.subr.mxu0 0.0
        %393 = vmatpush1.msra.mxu0 0.0
        %394 = vmatprep.subr.mxu0 0.0
        %395 = vmatpush1.msra.mxu0 0.0
        %396 = vmatprep.subr.mxu0 0.0
        %397 = vmatpush1.msra.mxu0 0.0
        %398 = vmatprep.subr.mxu0 0.0
        %399 = vmatpush1.msra.mxu0 0.0
        %400 = vmatprep.subr.mxu0 0.0
        %401 = vmatpush1.msra.mxu0 0.0
        %402 = vmatprep.subr.mxu0 0.0
        %403 = vmatpush1.msra.mxu0 0.0
        %404 = vmatprep.subr.mxu0 0.0
        %405 = vmatpush1.msra.mxu0 0.0
        %406 = vmatprep.subr.mxu0 0.0
        %407 = vmatpush1.msra.mxu0 0.0
        %408 = vmatprep.subr.mxu0 0.0
        %409 = vmatpush1.msra.mxu0 0.0
        %410 = vmatprep.subr.mxu0 0.0
        %411 = vmatpush1.msra.mxu0 %v366
        %412 = vmatprep.subr.mxu0 0.0
        %413 = vmatpush1.msra.mxu0 %v365
        %414 = vmatprep.subr.mxu0 0.0
        %415 = vmatpush1.msra.mxu0 %v364
        %416 = vmatprep.subr.mxu0 0.0
        %417 = vmatpush1.msra.mxu0 %v363
        %418 = vmatprep.subr.mxu0 0.0
        %419 = vmatpush2.msra.mxu0 0.0
        %420 = vmatprep.subr.mxu0 0.0
        %421 = vmatpush2.msra.mxu0 0.0
        %422 = vmatprep.subr.mxu0 0.0
        %423 = vmatpush2.msra.mxu0 0.0
        %424 = vmatprep.subr.mxu0 0.0
        %425 = vmatpush2.msra.mxu0 0.0
        %426 = vmatprep.subr.mxu0 0.0
        %427 = vmatpush2.msra.mxu0 0.0
        %428 = vmatprep.subr.mxu0 0.0
        %429 = vmatpush2.msra.mxu0 0.0
        %430 = vmatprep.subr.mxu0 0.0
        %431 = vmatpush2.msra.mxu0 0.0
        %432 = vmatprep.subr.mxu0 0.0
        %433 = vmatpush2.msra.mxu0 0.0
        %434 = vmatprep.subr.mxu0 0.0
        %435 = vmatpush2.msra.mxu0 0.0
        %436 = vmatprep.subr.mxu0 0.0
        %437 = vmatpush2.msra.mxu0 0.0
        %438 = vmatprep.subr.mxu0 0.0
        %439 = vmatpush2.msra.mxu0 0.0
        %440 = vmatprep.subr.mxu0 0.0
        %441 = vmatpush2.msra.mxu0 0.0
        %442 = vmatprep.subr.mxu0 0.0
        %443 = vmatpush2.msra.mxu0 0.0
        %444 = vmatprep.subr.mxu0 0.0
        %445 = vmatpush2.msra.mxu0 0.0
        %446 = vmatprep.subr.mxu0 0.0
        %447 = vmatpush2.msra.mxu0 0.0
        %448 = vmatprep.subr.mxu0 0.0
        %449 = vmatpush2.msra.mxu0 0.0
        %450 = vmatprep.mubr.f32.mxu0 0.0
        %451 = vmatmul.mubr.f32.gmra.mxu0 %v375
        %v452 = vpop.f32.mrf.mxu0
        %v453 = vadd.f32 %v372, %v452
        %v454 = vpop.f32.mrf.mxu0
        %455 = vmatprep.mubr.f32.mxu0 0.0
        %456 = vmatmul.mubr.f32.gmra.mxu0 %v378
        %v457 = vpop.f32.mrf.mxu0
        %v458 = vadd.f32 %v372, %v457
        %v459 = vpop.f32.mrf.mxu0
        %460 = vmatprep.mubr.f32.mxu0 0.0
        %461 = vmatmul.mubr.f32.gmra.mxu0 %v381
        %v462 = vpop.f32.mrf.mxu0
        %v463 = vadd.f32 %v372, %v462
        %v464 = vpop.f32.mrf.mxu0
        %465 = vmatprep.mubr.f32.mxu0 0.0
        %466 = vmatmul.mubr.f32.gmra.mxu0 %v384
        %v467 = vpop.f32.mrf.mxu0
        %v468 = vadd.f32 %v372, %v467
        %v469 = vpop.f32.mrf.mxu0
        %470 = vdwg.mxu0
        %v471 = vmul.f32 %v453, %v453
        %v472 = vmul.f32 %v458, %v458
        %v473 = vmul.f32 %v463, %v463
        %v474 = vmul.f32 %v468, %v468
        %vm475 = vcmask 130048
        %v476 = vsel %vm475, %v471, 0.0
        %477 = vadd.xlane.f32.xlu0 %v476
        %v478 = vpop.xlane.xlu0 %477
        %v479 = vsel %vm475, %v472, 0.0
        %480 = vadd.xlane.f32.xlu0 %v479
        %v481 = vpop.xlane.xlu0 %480
        %v482 = vsel %vm475, %v473, 0.0
        %483 = vadd.xlane.f32.xlu0 %v482
        %v484 = vpop.xlane.xlu0 %483
        %v485 = vsel %vm475, %v474, 0.0
        %486 = vadd.xlane.f32.xlu0 %v485
        %v487 = vpop.xlane.xlu0 %486
        %v488 = vmax.f32 %v478, 1e-24
        %v489 = vmax.f32 %v481, 1e-24
        %v490 = vmax.f32 %v484, 1e-24
        %v491 = vmax.f32 %v487, 1e-24
        %v492 = vrsqrt.pop %v488
        %v493 = vrsqrt.pop %v489
        %v494 = vrsqrt.pop %v490
        %v495 = vrsqrt.pop %v491
        %v496 = vmul.f32 %v453, %v492
        %v497 = vmul.f32 %v458, %v493
        %v498 = vmul.f32 %v463, %v494
        %v499 = vmul.f32 %v468, %v495
        %500 = vst.msk [vmem:[%s226] sm:$0xff] %vm475, %v496
        %501 = vst.msk [vmem:[%s226 + $0x8] sm:$0xff] %vm475, %v497
        %502 = vst.msk [vmem:[%s226 + $0x10] sm:$0xff] %vm475, %v498
        %503 = vst.msk [vmem:[%s226 + $0x18] sm:$0xff] %vm475, %v499
        %s504 = sand.u32 %s134, 1
        %s505 = sand.u32 %s134, 1
        %s506 = smul.addr %s505, 32
        %s507 = scalar_lea.vmem [#allocation2], %s506
        // Predicated region
        $region41: #{tpu_custom_call.1} parent=39 // pred_check
          %p508 = pneg %p144
        $region42: #{tpu_custom_call.1} parent=39 // pred_check_branch
          %510 = sbr.rel (%p508) target = $region44
        $region43: #{tpu_custom_call.1} parent=39 // pred_region
          %s511 = smul.u32 4, %s16
          %s512 = ssub.s32 25, %s511
          %p513 = scmp.lt.s32.totalorder %s512, 4
          %s514 = scalar_select %p513, %s512, 4
          %s515 = smul.u32 128, %s514
          %p516 = scmp.ne.s32.totalorder 0, %s515
          %s517 = smul.addr %s511, 8
          %s518 = scalar_lea.vmem %s5, %s517
          // Predicated region
          $region45: #{tpu_custom_call.1} parent=43 // pred_check
            %p519 = pneg %p516
          $region46: #{tpu_custom_call.1} parent=43 // pred_check_branch
            %521 = sbr.rel (%p519) target = $region48
          $region47: #{tpu_custom_call.1} parent=43 // pred_region
            // Predicated region
            $region49: #{tpu_custom_call.1} parent=47 // pred_check
              _
            $region50: #{tpu_custom_call.1} parent=47 // pred_check_branch
              %523 = sbr.rel (0) target = $region52
            $region51: #{tpu_custom_call.1} parent=47 // pred_region
              // Predicated region
              $region71: #{tpu_custom_call.1} parent=51 // pred_check
                _
              $region72: #{tpu_custom_call.1} parent=51 // pred_check_branch
                %579 = sbr.rel (0) target = $region74
              $region73: #{tpu_custom_call.1} parent=51 // pred_region
                %s580 = sshrl.u32 %s514, 2
                // While loop
                $region75: #{tpu_custom_call.1} parent=73 // loop_pre_header
                  _
                $region76: #{tpu_custom_call.1} parent=73 // loop_header
                  %s582 = sphi 0, %s584
                  %p583 = scmp.ge.s32.totalorder %s582, %s580
                  %s587 = sphi 0, %s600
                  %s588 = sphi %s507, %s603
                  %s589 = sphi %s518, %s604
                $region77: #{tpu_custom_call.1} parent=73 // loop_header_branch
                  %586 = sbr.rel (%p583) target = $region81
                $region78: #{tpu_custom_call.1} parent=73 // loop_body
                  %v590 = vld [vmem:[%s588] sm:$0xff]
                  %591 = vst [vmem:[%s589] sm:$0xff] %v590
                  %v592 = vld [vmem:[%s588 + $0x8] sm:$0xff]
                  %593 = vst [vmem:[%s589 + $0x8] sm:$0xff] %v592
                  %v594 = vld [vmem:[%s588 + $0x10] sm:$0xff]
                  %595 = vst [vmem:[%s589 + $0x10] sm:$0xff] %v594
                  %v596 = vld [vmem:[%s588 + $0x18] sm:$0xff]
                  %597 = vst [vmem:[%s589 + $0x18] sm:$0xff] %v596
                  %s598 = sadd.s32 1, %s587
                  %p599 = scmp.ge.s32.totalorder %s598, %s580
                  %s600 = scalar_select %p599, 0, %s598
                  %s601 = smul.u32 %s600, 32
                  %s602 = smul.u32 %s600, 32
                  %s603 = scalar_lea.vmem %s507, %s601 [#allocation2]
                  %s604 = scalar_lea.vmem %s518, %s602
                $region79: #{tpu_custom_call.1} parent=73 // loop_footer
                  %s584 = sadd.s32 %s582, 1
                $region80: #{tpu_custom_call.1} parent=73 // loop_footer_branch
                  %581 = sbr.rel target = $region76
                $region81: #{tpu_custom_call.1} parent=73 // loop_exit
                  _
                %s605 = sshrl.u32 %s514, 2
                %s606 = sand.u32 %s514, 3
                %s607 = smul.u32 %s605, 4
                %s608 = smul.u32 8, %s607
                %s609 = scalar_lea.vmem %s507, %s608 [#allocation2]
                %s610 = smul.u32 8, %s607
                %s611 = scalar_lea.vmem %s518, %s610
                // While loop
                $region82: #{tpu_custom_call.1} parent=73 // loop_pre_header
                  _
                $region83: #{tpu_custom_call.1} parent=73 // loop_header
                  %s613 = sphi 0, %s615
                  %p614 = scmp.ge.s32.totalorder %s613, %s606
                  %s618 = sphi 0, %s625
                  %s619 = sphi %s609, %s628
                  %s620 = sphi %s611, %s629
                $region84: #{tpu_custom_call.1} parent=73 // loop_header_branch
                  %617 = sbr.rel (%p614) target = $region88
                $region85: #{tpu_custom_call.1} parent=73 // loop_body
                  %v621 = vld [vmem:[%s619] sm:$0xff]
                  %622 = vst [vmem:[%s620] sm:$0xff] %v621
                  %s623 = sadd.s32 1, %s618
                  %p624 = scmp.ge.s32.totalorder %s623, %s606
                  %s625 = scalar_select %p624, 0, %s623
                  %s626 = smul.u32 %s625, 8
                  %s627 = smul.u32 %s625, 8
                  %s628 = scalar_lea.vmem %s609, %s626 [#allocation2]
                  %s629 = scalar_lea.vmem %s611, %s627
                $region86: #{tpu_custom_call.1} parent=73 // loop_footer
                  %s615 = sadd.s32 %s613, 1
                $region87: #{tpu_custom_call.1} parent=73 // loop_footer_branch
                  %612 = sbr.rel target = $region83
                $region88: #{tpu_custom_call.1} parent=73 // loop_exit
                  _
              $region74: #{tpu_custom_call.1} parent=51 // pred_fallthru
                _
              // Predicated region
              $region89: #{tpu_custom_call.1} parent=51 // pred_check
                _
              $region90: #{tpu_custom_call.1} parent=51 // pred_check_branch
                %631 = sbr.rel target = $region92
              $region91: #{tpu_custom_call.1} parent=51 // pred_region
                _
              $region92: #{tpu_custom_call.1} parent=51 // pred_fallthru
                _
            $region52: #{tpu_custom_call.1} parent=47 // pred_fallthru
              _
            // Predicated region
            $region53: #{tpu_custom_call.1} parent=47 // pred_check
              _
            $region54: #{tpu_custom_call.1} parent=47 // pred_check_branch
              %525 = sbr.rel target = $region56
            $region55: #{tpu_custom_call.1} parent=47 // pred_region
              %s527 = ssub.s32 256, 1
              %s528 = sshrl.u32 %s514, 2
              // While loop
              $region57: #{tpu_custom_call.1} parent=55 // loop_pre_header
                _
              $region58: #{tpu_custom_call.1} parent=55 // loop_header
                %s530 = sphi 0, %s532
                %p531 = scmp.ge.s32.totalorder %s530, %s528
                %s535 = sphi 0, %s548
                %s536 = sphi %s507, %s551
                %s537 = sphi %s518, %s552
              $region59: #{tpu_custom_call.1} parent=55 // loop_header_branch
                %534 = sbr.rel (%p531) target = $region63
              $region60: #{tpu_custom_call.1} parent=55 // loop_body
                %v538 = vld [vmem:[%s536] sm:%s527]
                %539 = vst [vmem:[%s537] sm:%s527] %v538
                %v540 = vld [vmem:[%s536 + $0x8] sm:%s527]
                %541 = vst [vmem:[%s537 + $0x8] sm:%s527] %v540
                %v542 = vld [vmem:[%s536 + $0x10] sm:%s527]
                %543 = vst [vmem:[%s537 + $0x10] sm:%s527] %v542
                %v544 = vld [vmem:[%s536 + $0x18] sm:%s527]
                %545 = vst [vmem:[%s537 + $0x18] sm:%s527] %v544
                %s546 = sadd.s32 1, %s535
                %p547 = scmp.ge.s32.totalorder %s546, %s528
                %s548 = scalar_select %p547, 0, %s546
                %s549 = smul.u32 %s548, 32
                %s550 = smul.u32 %s548, 32
                %s551 = scalar_lea.vmem %s507, %s549 [#allocation2]
                %s552 = scalar_lea.vmem %s518, %s550
              $region61: #{tpu_custom_call.1} parent=55 // loop_footer
                %s532 = sadd.s32 %s530, 1
              $region62: #{tpu_custom_call.1} parent=55 // loop_footer_branch
                %529 = sbr.rel target = $region58
              $region63: #{tpu_custom_call.1} parent=55 // loop_exit
                _
              %s553 = sshrl.u32 %s514, 2
              %s554 = sand.u32 %s514, 3
              %s555 = smul.u32 %s553, 4
              %s556 = smul.u32 8, %s555
              %s557 = scalar_lea.vmem %s507, %s556 [#allocation2]
              %s558 = smul.u32 8, %s555
              %s559 = scalar_lea.vmem %s518, %s558
              // While loop
              $region64: #{tpu_custom_call.1} parent=55 // loop_pre_header
                _
              $region65: #{tpu_custom_call.1} parent=55 // loop_header
                %s561 = sphi 0, %s563
                %p562 = scmp.ge.s32.totalorder %s561, %s554
                %s566 = sphi 0, %s573
                %s567 = sphi %s557, %s576
                %s568 = sphi %s559, %s577
              $region66: #{tpu_custom_call.1} parent=55 // loop_header_branch
                %565 = sbr.rel (%p562) target = $region70
              $region67: #{tpu_custom_call.1} parent=55 // loop_body
                %v569 = vld [vmem:[%s567] sm:%s527]
                %570 = vst [vmem:[%s568] sm:%s527] %v569
                %s571 = sadd.s32 1, %s566
                %p572 = scmp.ge.s32.totalorder %s571, %s554
                %s573 = scalar_select %p572, 0, %s571
                %s574 = smul.u32 %s573, 8
                %s575 = smul.u32 %s573, 8
                %s576 = scalar_lea.vmem %s557, %s574 [#allocation2]
                %s577 = scalar_lea.vmem %s559, %s575
              $region68: #{tpu_custom_call.1} parent=55 // loop_footer
                %s563 = sadd.s32 %s561, 1
              $region69: #{tpu_custom_call.1} parent=55 // loop_footer_branch
                %560 = sbr.rel target = $region65
              $region70: #{tpu_custom_call.1} parent=55 // loop_exit
                _
            $region56: #{tpu_custom_call.1} parent=47 // pred_fallthru
              _
          $region48: #{tpu_custom_call.1} parent=43 // pred_fallthru
            _
          %632 = vnop
        $region44: #{tpu_custom_call.1} parent=39 // pred_fallthru
          _
      $region40: #{tpu_custom_call.1} parent=5 // pred_fallthru
        _
      %p633 = scmp.le.s32.totalorder 2, %s11
      // Predicated region
      $region93: #{tpu_custom_call.1} parent=5 // pred_check
        %p634 = pneg %p633
      $region94: #{tpu_custom_call.1} parent=5 // pred_check_branch
        %636 = sbr.rel (%p634) target = $region96
      $region95: #{tpu_custom_call.1} parent=5 // pred_region
        %s637 = ssub.s32 %s11, 2
        // Predicated region
        $region97: #{tpu_custom_call.1} parent=95 // pred_check
          %p638 = pneg %p150
        $region98: #{tpu_custom_call.1} parent=95 // pred_check_branch
          %640 = sbr.rel (%p638) target = $region100
        $region99: #{tpu_custom_call.1} parent=95 // pred_region
          %s641 = sand.u32 %s135, 1
          %s642 = sand.u32 %s135, 1
          %s643 = smul.addr %s642, 32
          %s644 = scalar_lea.vmem [#allocation2], %s643
        $region100: #{tpu_custom_call.1} parent=95 // pred_fallthru
          _
      $region96: #{tpu_custom_call.1} parent=5 // pred_fallthru
        _
    $region6: #{tpu_custom_call.1} parent=1 // loop_footer
      %s15 = sadd.s32 1, %s11
    $region7: #{tpu_custom_call.1} parent=1 // loop_footer_branch
      %10 = sbr.rel target = $region3
    $region8: #{tpu_custom_call.1} parent=1 // loop_exit
      _

// kernel: tpu_custom_call.1
$region0: #{tpu_custom_call.1}
  #allocation0 [shape = 'u32[]', space=smem, size = 0x4, offset = 0x4, fixed_abs, tag = 'smem constant byte address 0x4 - core index']
  #allocation1 [shape = 'u32[144,128]{1,0:T(1,128)}', space=vmem, size = 0x12000, scoped, tag = 'internal scratch']
  %s0 = inlined_call_operand.vmem [shape: f32[200,32], index: 0, kind: input, shape index: {}]
  %s1 = inlined_call_operand.vmem [shape: f32[32,32], index: 1, kind: input, shape index: {}]
  %s2 = inlined_call_operand.vmem [shape: f32[1,32], index: 2, kind: input, shape index: {}]
  %s3 = inlined_call_operand.vmem [shape: f32[32,16], index: 3, kind: input, shape index: {}]
  %s4 = inlined_call_operand.vmem [shape: f32[1,16], index: 4, kind: input, shape index: {}]
  %s5 = inlined_call_operand.vmem [shape: f32[200,16], index: 5, kind: output, shape index: {}]
  %s6 = sld [smem:[#allocation0]]
  $region101: #{tpu_custom_call.1} parent=0
    _
  %s8 = ssub.s32 1, %s6
  %s9 = scalar_select 0, %s8, %s6
  $region1: #{tpu_custom_call.1} parent=0
    #allocation2 [shape = 'u8[32768]{0}', space=vmem, size = 0x8000, scoped, tag = 'output window, operand 0']
    loop: start=0, step=1, limit=9
    $region2: #{tpu_custom_call.1} parent=1 // loop_pre_header
      _
    $region3: #{tpu_custom_call.1} parent=1 // loop_header
      %s11 = sphi 0, %s15
      %p12 = scmp.ge.s32.totalorder %s11, 9
      %s21 = sphi 0, %s23
      %s24 = sphi 0, %s21
      %s25 = sphi 0, %s24
      %s41 = sphi 0, %s25
      %s45 = sphi 0, %s45
      %s47 = sphi 0, %s45
      %s48 = sphi 0, %s47
      %s62 = sphi 0, %s48
      %s66 = sphi 0, %s66
      %s68 = sphi 0, %s66
      %s69 = sphi 0, %s68
      %s83 = sphi 0, %s69
      %s87 = sphi 0, %s87
      %s89 = sphi 0, %s87
      %s90 = sphi 0, %s89
      %s104 = sphi 0, %s90
      %s108 = sphi 0, %s108
      %s110 = sphi 0, %s108
      %s111 = sphi 0, %s110
      %s125 = sphi 0, %s111
      %s131 = sphi 0, %s133
      %s134 = sphi 0, %s131
      %s135 = sphi 0, %s134
      %s151 = sphi 0, %s135
    $region4: #{tpu_custom_call.1} parent=1 // loop_header_branch
      %14 = sbr.rel (%p12) target = $region8
    $region5: #{tpu_custom_call.1} parent=1 // loop_body
      %s16 = ssub.s32 %s11, 1
      %s17 = ssub.s32 %s11, 2
      %s18 = sadd.s32 %s11, 1
      %s19 = ssub.s32 %s11, %s18
      %p20 = scmp.eq.s32.totalorder %s19, 0
      %s22 = sadd.s32 %s21, 1
      %s23 = scalar_select %p20, %s21, %s22
      %p26 = pneg %p20
      %p27 = scmp.eq.s32.totalorder %s11, 6
      %p28 = por %p26, %p27
      %p29 = scmp.ne.s32.totalorder %s21, %s24
      %p30 = scmp.eq.s32.totalorder %s11, 0
      %p31 = por %p29, %p30
      %p32 = scmp.ne.s32.totalorder %s21, %s24
      %p33 = scmp.eq.s32.totalorder %s16, 6
      %p34 = por %p32, %p33
      %p35 = scmp.ne.s32.totalorder %s24, %s25
      %p36 = scmp.eq.s32.totalorder %s16, 0
      %p37 = por %p35, %p36
      %p38 = scmp.ne.s32.totalorder %s24, %s25
      %p39 = scmp.eq.s32.totalorder %s17, 6
      %p40 = por %p38, %p39
      %p42 = scmp.ne.s32.totalorder %s25, %s41
      %p43 = scmp.eq.s32.totalorder %s17, 0
      %p44 = por %p42, %p43
      %s46 = sadd.s32 %s45, 1
      %p49 = scmp.eq.s32.totalorder %s11, 6
      %p50 = scmp.ne.s32.totalorder %s45, %s47
      %p51 = scmp.eq.s32.totalorder %s11, 0
      %p52 = por %p50, %p51
      %p53 = scmp.ne.s32.totalorder %s45, %s47
      %p54 = scmp.eq.s32.totalorder %s16, 6
      %p55 = por %p53, %p54
      %p56 = scmp.ne.s32.totalorder %s47, %s48
      %p57 = scmp.eq.s32.totalorder %s16, 0
      %p58 = por %p56, %p57
      %p59 = scmp.ne.s32.totalorder %s47, %s48
      %p60 = scmp.eq.s32.totalorder %s17, 6
      %p61 = por %p59, %p60
      %p63 = scmp.ne.s32.totalorder %s48, %s62
      %p64 = scmp.eq.s32.totalorder %s17, 0
      %p65 = por %p63, %p64
      %s67 = sadd.s32 %s66, 1
      %p70 = scmp.eq.s32.totalorder %s11, 6
      %p71 = scmp.ne.s32.totalorder %s66, %s68
      %p72 = scmp.eq.s32.totalorder %s11, 0
      %p73 = por %p71, %p72
      %p74 = scmp.ne.s32.totalorder %s66, %s68
      %p75 = scmp.eq.s32.totalorder %s16, 6
      %p76 = por %p74, %p75
      %p77 = scmp.ne.s32.totalorder %s68, %s69
      %p78 = scmp.eq.s32.totalorder %s16, 0
      %p79 = por %p77, %p78
      %p80 = scmp.ne.s32.totalorder %s68, %s69
      %p81 = scmp.eq.s32.totalorder %s17, 6
      %p82 = por %p80, %p81
      %p84 = scmp.ne.s32.totalorder %s69, %s83
      %p85 = scmp.eq.s32.totalorder %s17, 0
      %p86 = por %p84, %p85
      %s88 = sadd.s32 %s87, 1
      %p91 = scmp.eq.s32.totalorder %s11, 6
      %p92 = scmp.ne.s32.totalorder %s87, %s89
      %p93 = scmp.eq.s32.totalorder %s11, 0
      %p94 = por %p92, %p93
      %p95 = scmp.ne.s32.totalorder %s87, %s89
      %p96 = scmp.eq.s32.totalorder %s16, 6
      %p97 = por %p95, %p96
      %p98 = scmp.ne.s32.totalorder %s89, %s90
      %p99 = scmp.eq.s32.totalorder %s16, 0
      %p100 = por %p98, %p99
      %p101 = scmp.ne.s32.totalorder %s89, %s90
      %p102 = scmp.eq.s32.totalorder %s17, 6
      %p103 = por %p101, %p102
      %p105 = scmp.ne.s32.totalorder %s90, %s104
      %p106 = scmp.eq.s32.totalorder %s17, 0
      %p107 = por %p105, %p106
      %s109 = sadd.s32 %s108, 1
      %p112 = scmp.eq.s32.totalorder %s11, 6
      %p113 = scmp.ne.s32.totalorder %s108, %s110
      %p114 = scmp.eq.s32.totalorder %s11, 0
      %p115 = por %p113, %p114
      %p116 = scmp.ne.s32.totalorder %s108, %s110
      %p117 = scmp.eq.s32.totalorder %s16, 6
      %p118 = por %p116, %p117
      %p119 = scmp.ne.s32.totalorder %s110, %s111
      %p120 = scmp.eq.s32.totalorder %s16, 0
      %p121 = por %p119, %p120
      %p122 = scmp.ne.s32.totalorder %s110, %s111
      %p123 = scmp.eq.s32.totalorder %s17, 6
      %p124 = por %p122, %p123
      %p126 = scmp.ne.s32.totalorder %s111, %s125
      %p127 = scmp.eq.s32.totalorder %s17, 0
      %p128 = por %p126, %p127
      %s129 = ssub.s32 %s11, %s18
      %p130 = scmp.eq.s32.totalorder %s129, 0
      %s132 = sadd.s32 %s131, 1
      %s133 = scalar_select %p130, %s131, %s132
      %p136 = pneg %p130
      %p137 = scmp.eq.s32.totalorder %s11, 6
      %p138 = por %p136, %p137
      %p139 = scmp.ne.s32.totalorder %s131, %s134
      %p140 = scmp.eq.s32.totalorder %s11, 0
      %p141 = por %p139, %p140
      %p142 = scmp.ne.s32.totalorder %s131, %s134
      %p143 = scmp.eq.s32.totalorder %s16, 6
      %p144 = por %p142, %p143
      %p145 = scmp.ne.s32.totalorder %s134, %s135
      %p146 = scmp.eq.s32.totalorder %s16, 0
      %p147 = por %p145, %p146
      %p148 = scmp.ne.s32.totalorder %s134, %s135
      %p149 = scmp.eq.s32.totalorder %s17, 6
      %p150 = por %p148, %p149
      %p152 = scmp.ne.s32.totalorder %s135, %s151
      %p153 = scmp.eq.s32.totalorder %s17, 0
      %p154 = por %p152, %p153
      %p155 = scmp.le.s32.totalorder 1, %s11
      %p156 = scmp.lt.s32.totalorder %s11, 8
      %p157 = pnand %p155, %p156
      %p158 = pneg %p157
      // Predicated region
      $region9: #{tpu_custom_call.1} parent=5 // pred_check
        _
      $region10: #{tpu_custom_call.1} parent=5 // pred_check_branch
        %160 = sbr.rel (%p157) target = $region12
      $region11: #{tpu_custom_call.1} parent=5 // pred_region
        %s161 = ssub.s32 %s11, 1
        // Predicated region
        $region13: #{tpu_custom_call.1} parent=11 // pred_check
          %p162 = pneg %p58
        $region14: #{tpu_custom_call.1} parent=11 // pred_check_branch
          %164 = sbr.rel (%p162) target = $region16
        $region15: #{tpu_custom_call.1} parent=11 // pred_region
          _
        $region16: #{tpu_custom_call.1} parent=11 // pred_fallthru
          _
        // Predicated region
        $region17: #{tpu_custom_call.1} parent=11 // pred_check
          %p165 = pneg %p79
        $region18: #{tpu_custom_call.1} parent=11 // pred_check_branch
          %167 = sbr.rel (%p165) target = $region20
        $region19: #{tpu_custom_call.1} parent=11 // pred_region
          _
        $region20: #{tpu_custom_call.1} parent=11 // pred_fallthru
          _
        // Predicated region
        $region21: #{tpu_custom_call.1} parent=11 // pred_check
          %p168 = pneg %p100
        $region22: #{tpu_custom_call.1} parent=11 // pred_check_branch
          %170 = sbr.rel (%p168) target = $region24
        $region23: #{tpu_custom_call.1} parent=11 // pred_region
          _
        $region24: #{tpu_custom_call.1} parent=11 // pred_fallthru
          _
        // Predicated region
        $region25: #{tpu_custom_call.1} parent=11 // pred_check
          %p171 = pneg %p121
        $region26: #{tpu_custom_call.1} parent=11 // pred_check_branch
          %173 = sbr.rel (%p171) target = $region28
        $region27: #{tpu_custom_call.1} parent=11 // pred_region
          _
        $region28: #{tpu_custom_call.1} parent=11 // pred_fallthru
          _
      $region12: #{tpu_custom_call.1} parent=5 // pred_fallthru
        _
      %p174 = scmp.lt.s32.totalorder %s11, 7
      // Predicated region
      $region29: #{tpu_custom_call.1} parent=5 // pred_check
        %p175 = pneg %p174
      $region30: #{tpu_custom_call.1} parent=5 // pred_check_branch
        %177 = sbr.rel (%p175) target = $region32
      $region31: #{tpu_custom_call.1} parent=5 // pred_region
        // Predicated region
        $region33: #{tpu_custom_call.1} parent=31 // pred_check
          %p178 = pneg %p31
        $region34: #{tpu_custom_call.1} parent=31 // pred_check_branch
          %180 = sbr.rel (%p178) target = $region36
        $region35: #{tpu_custom_call.1} parent=31 // pred_region
          %s181 = smul.u32 4, %s11
          %s182 = ssub.s32 25, %s181
          %p183 = scmp.lt.s32.totalorder %s182, 4
          %s184 = scalar_select %p183, %s182, 4
          %s185 = smul.u32 128, %s184
          %p186 = scmp.lt.s32.totalorder %s181, 24
          %s187 = scalar_select %p186, %s181, 24
          %s188 = smul.addr %s187, 8
          %s189 = scalar_lea.vmem %s0, %s188
          %s190 = smul.u32 4, %s11
          %s191 = ssub.s32 25, %s190
          %p192 = scmp.lt.s32.totalorder %s191, 4
          %s193 = scalar_select %p192, %s191, 4
          %s194 = smul.u32 128, %s193
        $region36: #{tpu_custom_call.1} parent=31 // pred_fallthru
          _
      $region32: #{tpu_custom_call.1} parent=5 // pred_fallthru
        _
      %p195 = scmp.le.s32.totalorder 1, %s11
      %p196 = scmp.lt.s32.totalorder %s11, 8
      %p197 = pnand %p195, %p196
      %p198 = pneg %p197
      // Predicated region
      $region37: #{tpu_custom_call.1} parent=5 // pred_check
        _
      $region38: #{tpu_custom_call.1} parent=5 // pred_check_branch
        %200 = sbr.rel (%p197) target = $region40
      $region39: #{tpu_custom_call.1} parent=5 // pred_region
        %s201 = ssub.s32 %s11, 1
        %s202 = smul.u32 4, %s16
        %s203 = ssub.s32 25, %s202
        %p204 = scmp.lt.s32.totalorder %s203, 4
        %s205 = scalar_select %p204, %s203, 4
        %s206 = smul.u32 128, %s205
        %p207 = scmp.lt.s32.totalorder %s202, 24
        %s208 = scalar_select %p207, %s202, 24
        %s209 = smul.addr %s208, 8
        %s210 = scalar_lea.vmem %s0, %s209
        %p211 = pneg %p37
        %p212 = pneg %p34
        %p213 = pneg %p58
        %p214 = pneg %p55
        %p215 = pneg %p79
        %p216 = pneg %p76
        %p217 = pneg %p100
        %p218 = pneg %p97
        %p219 = pneg %p121
        %p220 = pneg %p118
        %p221 = pneg %p147
        %p222 = pneg %p144
        %s223 = sand.u32 %s134, 1
        %s224 = sand.u32 %s134, 1
        %s225 = smul.addr %s224, 32
        %s226 = scalar_lea.vmem [#allocation2], %s225
        %s227 = smul.u32 4, %s16
        %s228 = ssub.s32 25, %s227
        %p229 = scmp.lt.s32.totalorder %s228, 4
        %s230 = scalar_select %p229, %s228, 4
        %s231 = smul.u32 128, %s230
        %p232 = scmp.lt.s32.totalorder %s227, 24
        %s233 = scalar_select %p232, %s227, 24
        %s234 = smul.addr %s233, 8
        %s235 = scalar_lea.vmem %s0, %s234
        %s236 = smul.u32 4, %s16
        %s237 = ssub.s32 25, %s236
        %p238 = scmp.lt.s32.totalorder %s237, 4
        %s239 = scalar_select %p238, %s237, 4
        %s240 = smul.u32 128, %s239
        %s241 = smul.u32 4, %s16
        %s242 = ssub.s32 25, %s241
        %p243 = scmp.lt.s32.totalorder %s242, 4
        %s244 = scalar_select %p243, %s242, 4
        %s245 = smul.u32 128, %s244
        %v246 = vld [vmem:[%s235] sm:$0xff]
        %v247 = vld [vmem:[%s235 + $0x8] sm:$0xff]
        %v248 = vld [vmem:[%s235 + $0x10] sm:$0xff]
        %v249 = vld [vmem:[%s235 + $0x18] sm:$0xff]
        %v250 = vld [vmem:[%s1] sm:$0xff]
        %v251 = vld [vmem:[%s1 + $0x8] sm:$0xff]
        %v252 = vld [vmem:[%s1 + $0x10] sm:$0xff]
        %v253 = vld [vmem:[%s1 + $0x18] sm:$0xff]
        %v254 = vld [vmem:[%s2] sm:$0x1]
        %v256 = vlaneseq
        %v257 = vshrl.u32 %v256, 7
        %v258 = vsub.s32 0, %v257
        %v259 = vrot.slane %v254, %v258
        %vm261 = vcmask 261120
        %v263 = vsel %vm261, %v246, 0
        %v266 = vsel %vm261, %v247, 0
        %v269 = vsel %vm261, %v248, 0
        %v272 = vsel %vm261, %v249, 0
        %274 = vmatprep.subr.mxu0 0.0
        %275 = vmatpush1.msra.mxu0 0.0
        %276 = vmatprep.subr.mxu0 0.0
        %277 = vmatpush1.msra.mxu0 0.0
        %278 = vmatprep.subr.mxu0 0.0
        %279 = vmatpush1.msra.mxu0 0.0
        %280 = vmatprep.subr.mxu0 0.0
        %281 = vmatpush1.msra.mxu0 0.0
        %282 = vmatprep.subr.mxu0 0.0
        %283 = vmatpush1.msra.mxu0 0.0
        %284 = vmatprep.subr.mxu0 0.0
        %285 = vmatpush1.msra.mxu0 0.0
        %286 = vmatprep.subr.mxu0 0.0
        %287 = vmatpush1.msra.mxu0 0.0
        %288 = vmatprep.subr.mxu0 0.0
        %289 = vmatpush1.msra.mxu0 0.0
        %290 = vmatprep.subr.mxu0 0.0
        %291 = vmatpush1.msra.mxu0 0.0
        %292 = vmatprep.subr.mxu0 0.0
        %293 = vmatpush1.msra.mxu0 0.0
        %294 = vmatprep.subr.mxu0 0.0
        %295 = vmatpush1.msra.mxu0 0.0
        %296 = vmatprep.subr.mxu0 0.0
        %297 = vmatpush1.msra.mxu0 0.0
        %298 = vmatprep.subr.mxu0 0.0
        %299 = vmatpush1.msra.mxu0 %v253
        %300 = vmatprep.subr.mxu0 0.0
        %301 = vmatpush1.msra.mxu0 %v252
        %302 = vmatprep.subr.mxu0 0.0
        %303 = vmatpush1.msra.mxu0 %v251
        %304 = vmatprep.subr.mxu0 0.0
        %305 = vmatpush1.msra.mxu0 %v250
        %306 = vmatprep.subr.mxu0 0.0
        %307 = vmatpush2.msra.mxu0 0.0
        %308 = vmatprep.subr.mxu0 0.0
        %309 = vmatpush2.msra.mxu0 0.0
        %310 = vmatprep.subr.mxu0 0.0
        %311 = vmatpush2.msra.mxu0 0.0
        %312 = vmatprep.subr.mxu0 0.0
        %313 = vmatpush2.msra.mxu0 0.0
        %314 = vmatprep.subr.mxu0 0.0
        %315 = vmatpush2.msra.mxu0 0.0
        %316 = vmatprep.subr.mxu0 0.0
        %317 = vmatpush2.msra.mxu0 0.0
        %318 = vmatprep.subr.mxu0 0.0
        %319 = vmatpush2.msra.mxu0 0.0
        %320 = vmatprep.subr.mxu0 0.0
        %321 = vmatpush2.msra.mxu0 0.0
        %322 = vmatprep.subr.mxu0 0.0
        %323 = vmatpush2.msra.mxu0 0.0
        %324 = vmatprep.subr.mxu0 0.0
        %325 = vmatpush2.msra.mxu0 0.0
        %326 = vmatprep.subr.mxu0 0.0
        %327 = vmatpush2.msra.mxu0 0.0
        %328 = vmatprep.subr.mxu0 0.0
        %329 = vmatpush2.msra.mxu0 0.0
        %330 = vmatprep.subr.mxu0 0.0
        %331 = vmatpush2.msra.mxu0 0.0
        %332 = vmatprep.subr.mxu0 0.0
        %333 = vmatpush2.msra.mxu0 0.0
        %334 = vmatprep.subr.mxu0 0.0
        %335 = vmatpush2.msra.mxu0 0.0
        %336 = vmatprep.subr.mxu0 0.0
        %337 = vmatpush2.msra.mxu0 0.0
        %338 = vmatprep.mubr.f32.mxu0 0.0
        %339 = vmatmul.mubr.f32.gmra.mxu0 %v263
        %v340 = vpop.f32.mrf.mxu0
        %v341 = vadd.f32 %v259, %v340
        %v342 = vpop.f32.mrf.mxu0
        %343 = vmatprep.mubr.f32.mxu0 0.0
        %344 = vmatmul.mubr.f32.gmra.mxu0 %v266
        %v345 = vpop.f32.mrf.mxu0
        %v346 = vadd.f32 %v259, %v345
        %v347 = vpop.f32.mrf.mxu0
        %348 = vmatprep.mubr.f32.mxu0 0.0
        %349 = vmatmul.mubr.f32.gmra.mxu0 %v269
        %v350 = vpop.f32.mrf.mxu0
        %v351 = vadd.f32 %v259, %v350
        %v352 = vpop.f32.mrf.mxu0
        %353 = vmatprep.mubr.f32.mxu0 0.0
        %354 = vmatmul.mubr.f32.gmra.mxu0 %v272
        %v355 = vpop.f32.mrf.mxu0
        %v356 = vadd.f32 %v259, %v355
        %v357 = vpop.f32.mrf.mxu0
        %358 = vdwg.mxu0
        %v359 = vmax.f32 %v341, 0.0
        %v360 = vmax.f32 %v346, 0.0
        %v361 = vmax.f32 %v351, 0.0
        %v362 = vmax.f32 %v356, 0.0
        %v363 = vld [vmem:[%s3] sm:$0xff]
        %v364 = vld [vmem:[%s3 + $0x8] sm:$0xff]
        %v365 = vld [vmem:[%s3 + $0x10] sm:$0xff]
        %v366 = vld [vmem:[%s3 + $0x18] sm:$0xff]
        %v367 = vld [vmem:[%s4] sm:$0x1]
        %v369 = vlaneseq
        %v370 = vshrl.u32 %v369, 7
        %v371 = vsub.s32 0, %v370
        %v372 = vrot.slane %v367, %v371
        %v375 = vsel %vm261, %v359, 0
        %v378 = vsel %vm261, %v360, 0
        %v381 = vsel %vm261, %v361, 0
        %v384 = vsel %vm261, %v362, 0
        %386 = vmatprep.subr.mxu0 0.0
        %387 = vmatpush1.msra.mxu0 0.0
        %388 = vmatprep.subr.mxu0 0.0
        %389 = vmatpush1.msra.mxu0 0.0
        %390 = vmatprep.subr.mxu0 0.0
        %391 = vmatpush1.msra.mxu0 0.0
        %392 = vmatprep.subr.mxu0 0.0
        %393 = vmatpush1.msra.mxu0 0.0
        %394 = vmatprep.subr.mxu0 0.0
        %395 = vmatpush1.msra.mxu0 0.0
        %396 = vmatprep.subr.mxu0 0.0
        %397 = vmatpush1.msra.mxu0 0.0
        %398 = vmatprep.subr.mxu0 0.0
        %399 = vmatpush1.msra.mxu0 0.0
        %400 = vmatprep.subr.mxu0 0.0
        %401 = vmatpush1.msra.mxu0 0.0
        %402 = vmatprep.subr.mxu0 0.0
        %403 = vmatpush1.msra.mxu0 0.0
        %404 = vmatprep.subr.mxu0 0.0
        %405 = vmatpush1.msra.mxu0 0.0
        %406 = vmatprep.subr.mxu0 0.0
        %407 = vmatpush1.msra.mxu0 0.0
        %408 = vmatprep.subr.mxu0 0.0
        %409 = vmatpush1.msra.mxu0 0.0
        %410 = vmatprep.subr.mxu0 0.0
        %411 = vmatpush1.msra.mxu0 %v366
        %412 = vmatprep.subr.mxu0 0.0
        %413 = vmatpush1.msra.mxu0 %v365
        %414 = vmatprep.subr.mxu0 0.0
        %415 = vmatpush1.msra.mxu0 %v364
        %416 = vmatprep.subr.mxu0 0.0
        %417 = vmatpush1.msra.mxu0 %v363
        %418 = vmatprep.subr.mxu0 0.0
        %419 = vmatpush2.msra.mxu0 0.0
        %420 = vmatprep.subr.mxu0 0.0
        %421 = vmatpush2.msra.mxu0 0.0
        %422 = vmatprep.subr.mxu0 0.0
        %423 = vmatpush2.msra.mxu0 0.0
        %424 = vmatprep.subr.mxu0 0.0
        %425 = vmatpush2.msra.mxu0 0.0
        %426 = vmatprep.subr.mxu0 0.0
        %427 = vmatpush2.msra.mxu0 0.0
        %428 = vmatprep.subr.mxu0 0.0
        %429 = vmatpush2.msra.mxu0 0.0
        %430 = vmatprep.subr.mxu0 0.0
        %431 = vmatpush2.msra.mxu0 0.0
        %432 = vmatprep.subr.mxu0 0.0
        %433 = vmatpush2.msra.mxu0 0.0
        %434 = vmatprep.subr.mxu0 0.0
        %435 = vmatpush2.msra.mxu0 0.0
        %436 = vmatprep.subr.mxu0 0.0
        %437 = vmatpush2.msra.mxu0 0.0
        %438 = vmatprep.subr.mxu0 0.0
        %439 = vmatpush2.msra.mxu0 0.0
        %440 = vmatprep.subr.mxu0 0.0
        %441 = vmatpush2.msra.mxu0 0.0
        %442 = vmatprep.subr.mxu0 0.0
        %443 = vmatpush2.msra.mxu0 0.0
        %444 = vmatprep.subr.mxu0 0.0
        %445 = vmatpush2.msra.mxu0 0.0
        %446 = vmatprep.subr.mxu0 0.0
        %447 = vmatpush2.msra.mxu0 0.0
        %448 = vmatprep.subr.mxu0 0.0
        %449 = vmatpush2.msra.mxu0 0.0
        %450 = vmatprep.mubr.f32.mxu0 0.0
        %451 = vmatmul.mubr.f32.gmra.mxu0 %v375
        %v452 = vpop.f32.mrf.mxu0
        %v453 = vadd.f32 %v372, %v452
        %v454 = vpop.f32.mrf.mxu0
        %455 = vmatprep.mubr.f32.mxu0 0.0
        %456 = vmatmul.mubr.f32.gmra.mxu0 %v378
        %v457 = vpop.f32.mrf.mxu0
        %v458 = vadd.f32 %v372, %v457
        %v459 = vpop.f32.mrf.mxu0
        %460 = vmatprep.mubr.f32.mxu0 0.0
        %461 = vmatmul.mubr.f32.gmra.mxu0 %v381
        %v462 = vpop.f32.mrf.mxu0
        %v463 = vadd.f32 %v372, %v462
        %v464 = vpop.f32.mrf.mxu0
        %465 = vmatprep.mubr.f32.mxu0 0.0
        %466 = vmatmul.mubr.f32.gmra.mxu0 %v384
        %v467 = vpop.f32.mrf.mxu0
        %v468 = vadd.f32 %v372, %v467
        %v469 = vpop.f32.mrf.mxu0
        %470 = vdwg.mxu0
        %v471 = vmul.f32 %v453, %v453
        %v472 = vmul.f32 %v458, %v458
        %v473 = vmul.f32 %v463, %v463
        %v474 = vmul.f32 %v468, %v468
        %vm475 = vcmask 130048
        %v476 = vsel %vm475, %v471, 0.0
        %477 = vadd.xlane.f32.xlu0 %v476
        %v478 = vpop.xlane.xlu0 %477
        %v479 = vsel %vm475, %v472, 0.0
        %480 = vadd.xlane.f32.xlu0 %v479
        %v481 = vpop.xlane.xlu0 %480
        %v482 = vsel %vm475, %v473, 0.0
        %483 = vadd.xlane.f32.xlu0 %v482
        %v484 = vpop.xlane.xlu0 %483
        %v485 = vsel %vm475, %v474, 0.0
        %486 = vadd.xlane.f32.xlu0 %v485
        %v487 = vpop.xlane.xlu0 %486
        %v488 = vmax.f32 %v478, 1e-24
        %v489 = vmax.f32 %v481, 1e-24
        %v490 = vmax.f32 %v484, 1e-24
        %v491 = vmax.f32 %v487, 1e-24
        %v492 = vrsqrt.pop %v488
        %v493 = vrsqrt.pop %v489
        %v494 = vrsqrt.pop %v490
        %v495 = vrsqrt.pop %v491
        %v496 = vmul.f32 %v453, %v492
        %v497 = vmul.f32 %v458, %v493
        %v498 = vmul.f32 %v463, %v494
        %v499 = vmul.f32 %v468, %v495
        %500 = vst.msk [vmem:[%s226] sm:$0xff] %vm475, %v496
        %501 = vst.msk [vmem:[%s226 + $0x8] sm:$0xff] %vm475, %v497
        %502 = vst.msk [vmem:[%s226 + $0x10] sm:$0xff] %vm475, %v498
        %503 = vst.msk [vmem:[%s226 + $0x18] sm:$0xff] %vm475, %v499
        %s504 = sand.u32 %s134, 1
        %s505 = sand.u32 %s134, 1
        %s506 = smul.addr %s505, 32
        %s507 = scalar_lea.vmem [#allocation2], %s506
        // Predicated region
        $region41: #{tpu_custom_call.1} parent=39 // pred_check
          %p508 = pneg %p144
        $region42: #{tpu_custom_call.1} parent=39 // pred_check_branch
          %510 = sbr.rel (%p508) target = $region44
        $region43: #{tpu_custom_call.1} parent=39 // pred_region
          %s511 = smul.u32 4, %s16
          %s512 = ssub.s32 25, %s511
          %p513 = scmp.lt.s32.totalorder %s512, 4
          %s514 = scalar_select %p513, %s512, 4
          %s515 = smul.u32 128, %s514
          %p516 = scmp.ne.s32.totalorder 0, %s515
          %s517 = smul.addr %s511, 8
          %s518 = scalar_lea.vmem %s5, %s517
          // Predicated region
          $region45: #{tpu_custom_call.1} parent=43 // pred_check
            %p519 = pneg %p516
          $region46: #{tpu_custom_call.1} parent=43 // pred_check_branch
            %521 = sbr.rel (%p519) target = $region48
          $region47: #{tpu_custom_call.1} parent=43 // pred_region
            // Predicated region
            $region49: #{tpu_custom_call.1} parent=47 // pred_check
              _
            $region50: #{tpu_custom_call.1} parent=47 // pred_check_branch
              %523 = sbr.rel (0) target = $region52
            $region51: #{tpu_custom_call.1} parent=47 // pred_region
              // Predicated region
              $region71: #{tpu_custom_call.1} parent=51 // pred_check
                _
              $region72: #{tpu_custom_call.1} parent=51 // pred_check_branch
                %579 = sbr.rel (0) target = $region74
              $region73: #{tpu_custom_call.1} parent=51 // pred_region
                %s580 = sshrl.u32 %s514, 2
                // While loop
                $region75: #{tpu_custom_call.1} parent=73 // loop_pre_header
                  _
                $region76: #{tpu_custom_call.1} parent=73 // loop_header
                  %s582 = sphi 0, %s584
                  %p583 = scmp.ge.s32.totalorder %s582, %s580
                  %s587 = sphi 0, %s600
                  %s588 = sphi %s507, %s603
                  %s589 = sphi %s518, %s604
                $region77: #{tpu_custom_call.1} parent=73 // loop_header_branch
                  %586 = sbr.rel (%p583) target = $region81
                $region78: #{tpu_custom_call.1} parent=73 // loop_body
                  %v590 = vld [vmem:[%s588] sm:$0xff]
                  %591 = vst [vmem:[%s589] sm:$0xff] %v590
                  %v592 = vld [vmem:[%s588 + $0x8] sm:$0xff]
                  %593 = vst [vmem:[%s589 + $0x8] sm:$0xff] %v592
                  %v594 = vld [vmem:[%s588 + $0x10] sm:$0xff]
                  %595 = vst [vmem:[%s589 + $0x10] sm:$0xff] %v594
                  %v596 = vld [vmem:[%s588 + $0x18] sm:$0xff]
                  %597 = vst [vmem:[%s589 + $0x18] sm:$0xff] %v596
                  %s598 = sadd.s32 1, %s587
                  %p599 = scmp.ge.s32.totalorder %s598, %s580
                  %s600 = scalar_select %p599, 0, %s598
                  %s601 = smul.u32 %s600, 32
                  %s602 = smul.u32 %s600, 32
                  %s603 = scalar_lea.vmem %s507, %s601 [#allocation2]
                  %s604 = scalar_lea.vmem %s518, %s602
                $region79: #{tpu_custom_call.1} parent=73 // loop_footer
                  %s584 = sadd.s32 %s582, 1
                $region80: #{tpu_custom_call.1} parent=73 // loop_footer_branch
                  %581 = sbr.rel target = $region76
                $region81: #{tpu_custom_call.1} parent=73 // loop_exit
                  _
                %s605 = sshrl.u32 %s514, 2
                %s606 = sand.u32 %s514, 3
                %s607 = smul.u32 %s605, 4
                %s608 = smul.u32 8, %s607
                %s609 = scalar_lea.vmem %s507, %s608 [#allocation2]
                %s610 = smul.u32 8, %s607
                %s611 = scalar_lea.vmem %s518, %s610
                // While loop
                $region82: #{tpu_custom_call.1} parent=73 // loop_pre_header
                  _
                $region83: #{tpu_custom_call.1} parent=73 // loop_header
                  %s613 = sphi 0, %s615
                  %p614 = scmp.ge.s32.totalorder %s613, %s606
                  %s618 = sphi 0, %s625
                  %s619 = sphi %s609, %s628
                  %s620 = sphi %s611, %s629
                $region84: #{tpu_custom_call.1} parent=73 // loop_header_branch
                  %617 = sbr.rel (%p614) target = $region88
                $region85: #{tpu_custom_call.1} parent=73 // loop_body
                  %v621 = vld [vmem:[%s619] sm:$0xff]
                  %622 = vst [vmem:[%s620] sm:$0xff] %v621
                  %s623 = sadd.s32 1, %s618
                  %p624 = scmp.ge.s32.totalorder %s623, %s606
                  %s625 = scalar_select %p624, 0, %s623
                  %s626 = smul.u32 %s625, 8
                  %s627 = smul.u32 %s625, 8
                  %s628 = scalar_lea.vmem %s609, %s626 [#allocation2]
                  %s629 = scalar_lea.vmem %s611, %s627
                $region86: #{tpu_custom_call.1} parent=73 // loop_footer
                  %s615 = sadd.s32 %s613, 1
                $region87: #{tpu_custom_call.1} parent=73 // loop_footer_branch
                  %612 = sbr.rel target = $region83
                $region88: #{tpu_custom_call.1} parent=73 // loop_exit
                  _
              $region74: #{tpu_custom_call.1} parent=51 // pred_fallthru
                _
              // Predicated region
              $region89: #{tpu_custom_call.1} parent=51 // pred_check
                _
              $region90: #{tpu_custom_call.1} parent=51 // pred_check_branch
                %631 = sbr.rel target = $region92
              $region91: #{tpu_custom_call.1} parent=51 // pred_region
                _
              $region92: #{tpu_custom_call.1} parent=51 // pred_fallthru
                _
            $region52: #{tpu_custom_call.1} parent=47 // pred_fallthru
              _
            // Predicated region
            $region53: #{tpu_custom_call.1} parent=47 // pred_check
              _
            $region54: #{tpu_custom_call.1} parent=47 // pred_check_branch
              %525 = sbr.rel target = $region56
            $region55: #{tpu_custom_call.1} parent=47 // pred_region
              %s527 = ssub.s32 256, 1
              %s528 = sshrl.u32 %s514, 2
              // While loop
              $region57: #{tpu_custom_call.1} parent=55 // loop_pre_header
                _
              $region58: #{tpu_custom_call.1} parent=55 // loop_header
                %s530 = sphi 0, %s532
                %p531 = scmp.ge.s32.totalorder %s530, %s528
                %s535 = sphi 0, %s548
                %s536 = sphi %s507, %s551
                %s537 = sphi %s518, %s552
              $region59: #{tpu_custom_call.1} parent=55 // loop_header_branch
                %534 = sbr.rel (%p531) target = $region63
              $region60: #{tpu_custom_call.1} parent=55 // loop_body
                %v538 = vld [vmem:[%s536] sm:%s527]
                %539 = vst [vmem:[%s537] sm:%s527] %v538
                %v540 = vld [vmem:[%s536 + $0x8] sm:%s527]
                %541 = vst [vmem:[%s537 + $0x8] sm:%s527] %v540
                %v542 = vld [vmem:[%s536 + $0x10] sm:%s527]
                %543 = vst [vmem:[%s537 + $0x10] sm:%s527] %v542
                %v544 = vld [vmem:[%s536 + $0x18] sm:%s527]
                %545 = vst [vmem:[%s537 + $0x18] sm:%s527] %v544
                %s546 = sadd.s32 1, %s535
                %p547 = scmp.ge.s32.totalorder %s546, %s528
                %s548 = scalar_select %p547, 0, %s546
                %s549 = smul.u32 %s548, 32
                %s550 = smul.u32 %s548, 32
                %s551 = scalar_lea.vmem %s507, %s549 [#allocation2]
                %s552 = scalar_lea.vmem %s518, %s550
              $region61: #{tpu_custom_call.1} parent=55 // loop_footer
                %s532 = sadd.s32 %s530, 1
              $region62: #{tpu_custom_call.1} parent=55 // loop_footer_branch
                %529 = sbr.rel target = $region58
              $region63: #{tpu_custom_call.1} parent=55 // loop_exit
                _
              %s553 = sshrl.u32 %s514, 2
              %s554 = sand.u32 %s514, 3
              %s555 = smul.u32 %s553, 4
              %s556 = smul.u32 8, %s555
              %s557 = scalar_lea.vmem %s507, %s556 [#allocation2]
              %s558 = smul.u32 8, %s555
              %s559 = scalar_lea.vmem %s518, %s558
              // While loop
              $region64: #{tpu_custom_call.1} parent=55 // loop_pre_header
                _
              $region65: #{tpu_custom_call.1} parent=55 // loop_header
                %s561 = sphi 0, %s563
                %p562 = scmp.ge.s32.totalorder %s561, %s554
                %s566 = sphi 0, %s573
                %s567 = sphi %s557, %s576
                %s568 = sphi %s559, %s577
              $region66: #{tpu_custom_call.1} parent=55 // loop_header_branch
                %565 = sbr.rel (%p562) target = $region70
              $region67: #{tpu_custom_call.1} parent=55 // loop_body
                %v569 = vld [vmem:[%s567] sm:%s527]
                %570 = vst [vmem:[%s568] sm:%s527] %v569
                %s571 = sadd.s32 1, %s566
                %p572 = scmp.ge.s32.totalorder %s571, %s554
                %s573 = scalar_select %p572, 0, %s571
                %s574 = smul.u32 %s573, 8
                %s575 = smul.u32 %s573, 8
                %s576 = scalar_lea.vmem %s557, %s574 [#allocation2]
                %s577 = scalar_lea.vmem %s559, %s575
              $region68: #{tpu_custom_call.1} parent=55 // loop_footer
                %s563 = sadd.s32 %s561, 1
              $region69: #{tpu_custom_call.1} parent=55 // loop_footer_branch
                %560 = sbr.rel target = $region65
              $region70: #{tpu_custom_call.1} parent=55 // loop_exit
                _
            $region56: #{tpu_custom_call.1} parent=47 // pred_fallthru
              _
          $region48: #{tpu_custom_call.1} parent=43 // pred_fallthru
            _
          %632 = vnop
        $region44: #{tpu_custom_call.1} parent=39 // pred_fallthru
          _
      $region40: #{tpu_custom_call.1} parent=5 // pred_fallthru
        _
      %p633 = scmp.le.s32.totalorder 2, %s11
      // Predicated region
      $region93: #{tpu_custom_call.1} parent=5 // pred_check
        %p634 = pneg %p633
      $region94: #{tpu_custom_call.1} parent=5 // pred_check_branch
        %636 = sbr.rel (%p634) target = $region96
      $region95: #{tpu_custom_call.1} parent=5 // pred_region
        %s637 = ssub.s32 %s11, 2
        // Predicated region
        $region97: #{tpu_custom_call.1} parent=95 // pred_check
          %p638 = pneg %p150
        $region98: #{tpu_custom_call.1} parent=95 // pred_check_branch
          %640 = sbr.rel (%p638) target = $region100
        $region99: #{tpu_custom_call.1} parent=95 // pred_region
          %s641 = sand.u32 %s135, 1
          %s642 = sand.u32 %s135, 1
          %s643 = smul.addr %s642, 32
          %s644 = scalar_lea.vmem [#allocation2], %s643
        $region100: #{tpu_custom_call.1} parent=95 // pred_fallthru
          _
      $region96: #{tpu_custom_call.1} parent=5 // pred_fallthru
        _
    $region6: #{tpu_custom_call.1} parent=1 // loop_footer
      %s15 = sadd.s32 1, %s11
    $region7: #{tpu_custom_call.1} parent=1 // loop_footer_branch
      %10 = sbr.rel target = $region3
    $region8: #{tpu_custom_call.1} parent=1 // loop_exit
      _

</llo_original>
